<compile_context>
chip_gen: v7x
topology: tpu7x:2x2x1
jax: 0.10.0
libtpu: 0.0.40
codegen_flags: <defaults>
</compile_context>

<pallas_src>
import numpy as np
import jax
import jax.numpy as jnp
from jax import lax
from jax.experimental import pallas as pl
from jax.experimental.pallas import tpu as pltpu

KS = 3          # kernel size of every conv in the module
EPS = 1e-5      # PyTorch BatchNorm2d default eps


# ---------------------------------------------------------------------------
# Host-side folding helpers (pure numpy, run once per parameter set)
# ---------------------------------------------------------------------------
def _merged_weight_matrix(w_oihw, W, ks=KS):
    """(ks*W*Cin, W*Cout) matrix: applied to the tap-concatenated,
    lane-flattened activation rows it performs the kh/kw taps, the channel
    contraction and the W zero-pad in a single matmul."""
    co, ci, _, _ = w_oihw.shape
    p = ks // 2
    w = np.asarray(w_oihw, np.float32)
    G = np.zeros((ks, W * ci, W * co), np.float32)
    for kh in range(ks):
        for kw in range(ks):
            blk = w[:, :, kh, kw].T                              # (ci, co)
            for ow in range(W):
                iw = ow + kw - p
                if 0 <= iw < W:
                    G[kh, iw * ci:(iw + 1) * ci, ow * co:(ow + 1) * co] = blk
    return G.reshape(ks * W * ci, W * co)


def _bilinear_matrix(win, wout):
    """PyTorch F.interpolate bilinear, align_corners=False, along one axis."""
    M = np.zeros((wout, win), dtype=np.float32)
    scale = win / wout
    for j in range(wout):
        src = max((j + 0.5) * scale - 0.5, 0.0)
        i0 = min(int(np.floor(src)), win - 1)
        i1 = min(i0 + 1, win - 1)
        lam = src - i0
        M[j, i0] += 1.0 - lam
        M[j, i1] += lam
    return M


def _folded_interp_matrix(W, C, out):
    """Fold circular W pad + bilinear W resample + final crop into one
    (W*C, Wf*C) matrix on the lane-flattened (w, c) layout."""
    Wp = W + 2
    S = out + out // Wp
    c = out // S
    Wf = S - 2 * c if c > 0 else 0
    if Wf <= 0:
        return None, 0
    M = _bilinear_matrix(Wp, S)[c:S - c, :]                      # kept rows
    Mt = np.zeros((W, Wf), np.float32)
    for i in range(Wp):                                          # wrap pad cols
        Mt[(i - 1) % W, :] += M[:, i]
    return np.kron(Mt, np.eye(C, dtype=np.float32)), Wf          # (W*C, Wf*C)


# ---------------------------------------------------------------------------
# The single fused kernel (built for a static batch size / layer plan)
# ---------------------------------------------------------------------------
def _build_kernel(N, layer_meta, ks=KS):
    L = len(layer_meta)
    p = ks // 2

    def kernel(x_ref, *refs):
        g_sb     = refs[:2 * L]                    # (G, scale/bias) per layer
        gm_ref   = refs[2 * L]                     # folded interp matrix
        o_ref    = refs[2 * L + 1]                 # lane-dense output
        cat_refs = refs[2 * L + 2: 2 * L + 2 + L]  # tap-concat scratch / layer
        act_refs = refs[2 * L + 2 + L:]            # inter-layer activations

        src = x_ref                                # (N*Hin, W*Cin) f32
        act = None
        for li, (hin, hout, wci, wco) in enumerate(layer_meta):
            g_ref, sb_ref = g_sb[2 * li], g_sb[2 * li + 1]
            cat = cat_refs[li]
            M = N * hout
            # Assemble (N*hout, ks*wci): tap kh picks input rows 2*oh + kh - p
            # (stride-2 H subsample + H zero-pad) — strided reads, no matmul.
            for kh in range(ks):
                col0, col1 = kh * wci, (kh + 1) * wci
                lo = max(0, (p - kh + 1) // 2)                # first valid oh
                hi = min(hout - 1, (hin - 1 - kh + p) // 2)   # last valid oh
                if hi < lo:                                   # fully in H pad
                    cat[:, col0:col1] = jnp.zeros((M, wci), jnp.float32)
                    continue
                cnt = hi - lo + 1
                start = 2 * lo + kh - p
                if lo == 0 and hi == hout - 1 and hin == 2 * hout:
                    # valid for every output row: one strided read over the batch
                    cat[:, col0:col1] = src[pl.ds(start, M, stride=2), :]
                else:
                    for n in range(N):
                        if lo > 0:           # rows hitting the top H zero-pad
                            cat[pl.ds(n * hout, lo), col0:col1] = \
                                jnp.zeros((lo, wci), jnp.float32)
                        if hi < hout - 1:    # rows hitting the bottom H zero-pad
                            cat[pl.ds(n * hout + hi + 1, hout - 1 - hi), col0:col1] = \
                                jnp.zeros((hout - 1 - hi, wci), jnp.float32)
                        cat[pl.ds(n * hout + lo, cnt), col0:col1] = \
                            src[pl.ds(n * hin + start, cnt, stride=2), :]
            # One MXU matmul per conv layer: bf16 operands, f32 accumulation.
            conv = jnp.dot(cat[...].astype(jnp.bfloat16), g_ref[...],
                           preferred_element_type=jnp.float32)
            # Folded conv-bias + eval-mode BN and ReLU: f32 per-lane VPU work.
            act = jnp.maximum(conv * sb_ref[0:1, :] + sb_ref[1:2, :], 0.0)
            if li + 1 < L:
                act_refs[li][...] = act
                src = act_refs[li]
        # Circular W pad + bilinear W resample + crop: one lane-dense matmul.
        o_ref[...] = jnp.dot(act.astype(jnp.bfloat16), gm_ref[...],
                             preferred_element_type=jnp.float32)

    return kernel


# ---------------------------------------------------------------------------
# Full forward (matches Transform.forward)
# ---------------------------------------------------------------------------
def transform_forward(x_nchw, params, out=256, ks=KS):
    N, Cin0, H0, W = map(int, x_nchw.shape)

    layer_meta, operands = [], []
    hin = H0
    for lp in params:
        w = np.asarray(lp["w_oihw"], np.float32)
        co, ci = int(w.shape[0]), int(w.shape[1])
        hout = (hin - 1) // 2 + 1
        layer_meta.append((hin, hout, W * ci, W * co))
        G = _merged_weight_matrix(w, W, ks)
        sb = np.stack([np.tile(np.asarray(lp["scale"], np.float32), W),
                       np.tile(np.asarray(lp["bias"], np.float32), W)])
        operands += [jnp.asarray(G, jnp.bfloat16), jnp.asarray(sb, jnp.float32)]
        hin = hout
    H4 = hin
    C4 = int(np.asarray(params[-1]["w_oihw"]).shape[0])

    Gm, Wf = _folded_interp_matrix(W, C4, out)
    if Wf <= 0:
        # mirrors the module's degenerate x[..., 0:-0] empty crop
        return jnp.zeros((N, C4, H4, 0), jnp.float32)
    outc = Wf * C4
    padc = ((outc + 127) // 128) * 128           # lane-dense output store
    Gm_pad = np.zeros((W * C4, padc), np.float32)
    Gm_pad[:, :outc] = Gm
    operands.append(jnp.asarray(Gm_pad, jnp.bfloat16))

    # NCHW -> (N*H, W*C): channels interleaved on lanes (tiny one-off glue)
    x2 = jnp.transpose(x_nchw, (0, 2, 3, 1)).reshape(N * H0, W * Cin0)
    x2 = x2.astype(jnp.float32)

    scratch = [pltpu.VMEM((N * ho, ks * wi), jnp.float32)
               for (_, ho, wi, _) in layer_meta]               # tap-concat buffers
    scratch += [pltpu.VMEM((N * ho, wo), jnp.float32)
                for (_, ho, _, wo) in layer_meta[:-1]]         # inter-layer acts

    # Single gridless invocation: whole batch folded into matmul M.
    # (For large N or W, tile the batch with a grid + pl.Buffered(1) constants
    #  to respect the v7x VMEM budget; unnecessary at these shapes.)
    y = pl.pallas_call(
        _build_kernel(N, layer_meta, ks),
        out_shape=jax.ShapeDtypeStruct((N * H4, padc), jnp.float32),
        scratch_shapes=scratch,
    )(x2, *operands)

    # (N*H4, padc) -> NCHW (final tensor is < 1 KB)
    y = y[:, :outc].reshape(N, H4, Wf, C4)
    return jnp.transpose(y, (0, 3, 1, 2))


# ---------------------------------------------------------------------------
# Deterministic parameter construction (synthetic, eval-mode BN folded)
# ---------------------------------------------------------------------------
def init_params(key, in_c, out_c, out_fin, ks=KS):
    chans = [(in_c, out_c), (out_c, out_c), (out_c, out_c // 2), (out_c // 2, out_fin)]
    params = []
    for (ci, co) in chans:
        key, kw, kb, kg, kbe, km, kv = jax.random.split(key, 7)
        w_oihw = jax.random.normal(kw, (co, ci, ks, ks), jnp.float32) / np.sqrt(ks * ks * ci)
        b = 0.1 * jax.random.normal(kb, (co,), jnp.float32)
        gamma = 1.0 + 0.1 * jax.random.normal(kg, (co,), jnp.float32)
        beta = 0.1 * jax.random.normal(kbe, (co,), jnp.float32)
        mean = 0.1 * jax.random.normal(km, (co,), jnp.float32)
        var = 1.0 + 0.1 * jnp.abs(jax.random.normal(kv, (co,), jnp.float32))
        s = gamma / jnp.sqrt(var + EPS)
        bias = beta + (b - mean) * s              # conv bias + eval-mode BN folded
        params.append(dict(w_oihw=w_oihw, b=b, gamma=gamma, beta=beta,
                           mean=mean, var=var, scale=s, bias=bias))
    return params


# ---------------------------------------------------------------------------
# Pure-JAX reference (NCHW, f32 HIGHEST) used only as a correctness check
# ---------------------------------------------------------------------------
def reference_forward(x_nchw, params, out=256, ks=KS):
    p = ks // 2
    x = x_nchw
    for lp in params:
        x = jax.lax.conv_general_dilated(
            x, lp["w_oihw"], window_strides=(2, 1), padding=((p, p), (p, p)),
            dimension_numbers=("NCHW", "OIHW", "NCHW"),
            precision=lax.Precision.HIGHEST)
        x = x + lp["b"][None, :, None, None]
        x = (x - lp["mean"][None, :, None, None]) / jnp.sqrt(lp["var"] + EPS)[None, :, None, None]
        x = x * lp["gamma"][None, :, None, None] + lp["beta"][None, :, None, None]
        x = jnp.maximum(x, 0.0)
    x = jnp.concatenate([x[..., -1:], x, x[..., :1]], axis=3)
    Win = x.shape[3]
    S = out + out // Win
    M = jnp.asarray(_bilinear_matrix(Win, S))
    y = jnp.einsum("nchw,sw->nchs", x, M, precision=lax.Precision.HIGHEST)
    c = out // S
    stop = S - c if c > 0 else 0
    return y[..., c:stop]


if __name__ == "__main__":
    key = jax.random.PRNGKey(0)
    in_c, out_c, out_fin = 4, 8, 4
    kx, kp = jax.random.split(key)
    # NCHW input, like the PyTorch module: batch=2, channels=4, H=32, W=16
    x = jax.random.normal(kx, (2, in_c, 32, 16), jnp.float32)
    params = init_params(kp, in_c, out_c, out_fin)

    # forward(x, out=16): a small `out` keeps the final crop non-degenerate
    # (with out=256 and tiny W the module's own slice is empty by construction).
    out_arg = 16
    y = jax.block_until_ready(transform_forward(x, params, out=out_arg))
    y_ref = jax.block_until_ready(reference_forward(x, params, out=out_arg))

    assert y.shape == y_ref.shape, (y.shape, y_ref.shape)
    # Tolerance reflects the single-pass bf16 MXU matmuls (f32 accumulation)
    # vs the f32-HIGHEST reference; observed error is ~1e-2 worst case.
    np.testing.assert_allclose(np.asarray(y), np.asarray(y_ref), rtol=2e-2, atol=2e-2)
    print("KERNEL_OK")
</pallas_src>

<mosaic_0001>
module attributes {stable_mosaic.version = 11 : i64} {
  func.func @kernel(%arg0: memref<64x64xf32, #tpu.memory_space<vmem>>, %arg1: memref<192x128xbf16, #tpu.memory_space<vmem>>, %arg2: memref<2x128xf32, #tpu.memory_space<vmem>>, %arg3: memref<384x128xbf16, #tpu.memory_space<vmem>>, %arg4: memref<2x128xf32, #tpu.memory_space<vmem>>, %arg5: memref<384x64xbf16, #tpu.memory_space<vmem>>, %arg6: memref<2x64xf32, #tpu.memory_space<vmem>>, %arg7: memref<192x64xbf16, #tpu.memory_space<vmem>>, %arg8: memref<2x64xf32, #tpu.memory_space<vmem>>, %arg9: memref<64x128xbf16, #tpu.memory_space<vmem>>, %arg10: memref<4x128xf32, #tpu.memory_space<vmem>>, %arg11: memref<32x192xf32, #tpu.memory_space<vmem>>, %arg12: memref<16x384xf32, #tpu.memory_space<vmem>>, %arg13: memref<8x384xf32, #tpu.memory_space<vmem>>, %arg14: memref<4x192xf32, #tpu.memory_space<vmem>>, %arg15: memref<32x128xf32, #tpu.memory_space<vmem>>, %arg16: memref<16x128xf32, #tpu.memory_space<vmem>>, %arg17: memref<8x64xf32, #tpu.memory_space<vmem>>) attributes {dimension_semantics = [], scalar_prefetch = 0 : i64, scratch_operands = 7 : i64, tpu.core_type = #tpu.core_type<tc>} {
    %cst = arith.constant 0.000000e+00 : f32
    %0 = vector.broadcast %cst : f32 to vector<1x64xf32>
    %c0 = arith.constant 0 : index
    %c0_0 = arith.constant 0 : index
    %1 = vector.load %arg11[%c0, %c0_0] : memref<32x192xf32, #tpu.memory_space<vmem>>, vector<1x64xf32>
    tpu.vector_store %arg11[%c0, %c0_0], %0 {strides = array<i32>} : memref<32x192xf32, #tpu.memory_space<vmem>>, vector<1x64xf32>,
    %c1 = arith.constant 1 : index
    %c0_1 = arith.constant 0 : index
    %2 = tpu.strided_load %arg0[%c1, %c0_1] {strides = array<i32: 2, 1>} : memref<64x64xf32, #tpu.memory_space<vmem>>, vector<15x64xf32>
    %c1_2 = arith.constant 1 : index
    %c0_3 = arith.constant 0 : index
    %3 = vector.load %arg11[%c1_2, %c0_3] : memref<32x192xf32, #tpu.memory_space<vmem>>, vector<15x64xf32>
    tpu.vector_store %arg11[%c1_2, %c0_3], %2 {strides = array<i32>} : memref<32x192xf32, #tpu.memory_space<vmem>>, vector<15x64xf32>,
    %cst_4 = arith.constant 0.000000e+00 : f32
    %4 = vector.broadcast %cst_4 : f32 to vector<1x64xf32>
    %c16 = arith.constant 16 : index
    %c0_5 = arith.constant 0 : index
    %5 = vector.load %arg11[%c16, %c0_5] : memref<32x192xf32, #tpu.memory_space<vmem>>, vector<1x64xf32>
    tpu.vector_store %arg11[%c16, %c0_5], %4 {strides = array<i32>} : memref<32x192xf32, #tpu.memory_space<vmem>>, vector<1x64xf32>,
    %c33 = arith.constant 33 : index
    %c0_6 = arith.constant 0 : index
    %6 = tpu.strided_load %arg0[%c33, %c0_6] {strides = array<i32: 2, 1>} : memref<64x64xf32, #tpu.memory_space<vmem>>, vector<15x64xf32>
    %c17 = arith.constant 17 : index
    %c0_7 = arith.constant 0 : index
    %7 = vector.load %arg11[%c17, %c0_7] : memref<32x192xf32, #tpu.memory_space<vmem>>, vector<15x64xf32>
    tpu.vector_store %arg11[%c17, %c0_7], %6 {strides = array<i32>} : memref<32x192xf32, #tpu.memory_space<vmem>>, vector<15x64xf32>,
    %c0_8 = arith.constant 0 : index
    %c0_9 = arith.constant 0 : index
    %8 = tpu.strided_load %arg0[%c0_8, %c0_9] {strides = array<i32: 2, 1>} : memref<64x64xf32, #tpu.memory_space<vmem>>, vector<32x64xf32>
    %c0_10 = arith.constant 0 : index
    %c64 = arith.constant 64 : index
    %9 = vector.load %arg11[%c0_10, %c64] : memref<32x192xf32, #tpu.memory_space<vmem>>, vector<32x64xf32>
    tpu.vector_store %arg11[%c0_10, %c64], %8 {strides = array<i32>} : memref<32x192xf32, #tpu.memory_space<vmem>>, vector<32x64xf32>,
    %c1_11 = arith.constant 1 : index
    %c0_12 = arith.constant 0 : index
    %10 = tpu.strided_load %arg0[%c1_11, %c0_12] {strides = array<i32: 2, 1>} : memref<64x64xf32, #tpu.memory_space<vmem>>, vector<32x64xf32>
    %c0_13 = arith.constant 0 : index
    %c128 = arith.constant 128 : index
    %11 = vector.load %arg11[%c0_13, %c128] : memref<32x192xf32, #tpu.memory_space<vmem>>, vector<32x64xf32>
    tpu.vector_store %arg11[%c0_13, %c128], %10 {strides = array<i32>} : memref<32x192xf32, #tpu.memory_space<vmem>>, vector<32x64xf32>,
    %c0_14 = arith.constant 0 : index
    %c0_15 = arith.constant 0 : index
    %12 = vector.load %arg11[%c0_14, %c0_15] : memref<32x192xf32, #tpu.memory_space<vmem>>, vector<32x192xf32>
    %13 = arith.truncf %12 : vector<32x192xf32> to vector<32x192xbf16>
    %c0_16 = arith.constant 0 : index
    %c0_17 = arith.constant 0 : index
    %14 = vector.load %arg1[%c0_16, %c0_17] : memref<192x128xbf16, #tpu.memory_space<vmem>>, vector<192x128xbf16>
    %cst_18 = arith.constant dense<0.000000e+00> : vector<32x128xf32>
    %15 = tpu.matmul %13, %14, %cst_18 {dimension_numbers = #tpu.dot_dimension_numbers<[1], [0], [0], [1], [0, 0, 1, 1], [], []>} : vector<32x192xbf16>, vector<192x128xbf16>, vector<32x128xf32> -> vector<32x128xf32>
    %c0_19 = arith.constant 0 : index
    %c0_20 = arith.constant 0 : index
    %16 = vector.load %arg2[%c0_19, %c0_20] : memref<2x128xf32, #tpu.memory_space<vmem>>, vector<1x128xf32>
    %17 = vector.broadcast %16 : vector<1x128xf32> to vector<32x128xf32>
    %18 = arith.mulf %15, %17 : vector<32x128xf32>
    %c1_21 = arith.constant 1 : index
    %c0_22 = arith.constant 0 : index
    %19 = vector.load %arg2[%c1_21, %c0_22] : memref<2x128xf32, #tpu.memory_space<vmem>>, vector<1x128xf32>
    %20 = vector.broadcast %19 : vector<1x128xf32> to vector<32x128xf32>
    %21 = arith.addf %18, %20 : vector<32x128xf32>
    %cst_23 = arith.constant 0.000000e+00 : f32
    %22 = vector.broadcast %cst_23 : f32 to vector<32x128xf32>
    %23 = arith.maximumf %21, %22 : vector<32x128xf32>
    %c0_24 = arith.constant 0 : index
    %c0_25 = arith.constant 0 : index
    %24 = vector.load %arg15[%c0_24, %c0_25] : memref<32x128xf32, #tpu.memory_space<vmem>>, vector<32x128xf32>
    tpu.vector_store %arg15[%c0_24, %c0_25], %23 {strides = array<i32>} : memref<32x128xf32, #tpu.memory_space<vmem>>, vector<32x128xf32>,
    %cst_26 = arith.constant 0.000000e+00 : f32
    %25 = vector.broadcast %cst_26 : f32 to vector<1x128xf32>
    %c0_27 = arith.constant 0 : index
    %c0_28 = arith.constant 0 : index
    %26 = vector.load %arg12[%c0_27, %c0_28] : memref<16x384xf32, #tpu.memory_space<vmem>>, vector<1x128xf32>
    tpu.vector_store %arg12[%c0_27, %c0_28], %25 {strides = array<i32>} : memref<16x384xf32, #tpu.memory_space<vmem>>, vector<1x128xf32>,
    %c1_29 = arith.constant 1 : index
    %c0_30 = arith.constant 0 : index
    %27 = tpu.strided_load %arg15[%c1_29, %c0_30] {strides = array<i32: 2, 1>} : memref<32x128xf32, #tpu.memory_space<vmem>>, vector<7x128xf32>
    %c1_31 = arith.constant 1 : index
    %c0_32 = arith.constant 0 : index
    %28 = vector.load %arg12[%c1_31, %c0_32] : memref<16x384xf32, #tpu.memory_space<vmem>>, vector<7x128xf32>
    tpu.vector_store %arg12[%c1_31, %c0_32], %27 {strides = array<i32>} : memref<16x384xf32, #tpu.memory_space<vmem>>, vector<7x128xf32>,
    %cst_33 = arith.constant 0.000000e+00 : f32
    %29 = vector.broadcast %cst_33 : f32 to vector<1x128xf32>
    %c8 = arith.constant 8 : index
    %c0_34 = arith.constant 0 : index
    %30 = vector.load %arg12[%c8, %c0_34] : memref<16x384xf32, #tpu.memory_space<vmem>>, vector<1x128xf32>
    tpu.vector_store %arg12[%c8, %c0_34], %29 {strides = array<i32>} : memref<16x384xf32, #tpu.memory_space<vmem>>, vector<1x128xf32>,
    %c17_35 = arith.constant 17 : index
    %c0_36 = arith.constant 0 : index
    %31 = tpu.strided_load %arg15[%c17_35, %c0_36] {strides = array<i32: 2, 1>} : memref<32x128xf32, #tpu.memory_space<vmem>>, vector<7x128xf32>
    %c9 = arith.constant 9 : index
    %c0_37 = arith.constant 0 : index
    %32 = vector.load %arg12[%c9, %c0_37] : memref<16x384xf32, #tpu.memory_space<vmem>>, vector<7x128xf32>
    tpu.vector_store %arg12[%c9, %c0_37], %31 {strides = array<i32>} : memref<16x384xf32, #tpu.memory_space<vmem>>, vector<7x128xf32>,
    %c0_38 = arith.constant 0 : index
    %c0_39 = arith.constant 0 : index
    %33 = tpu.strided_load %arg15[%c0_38, %c0_39] {strides = array<i32: 2, 1>} : memref<32x128xf32, #tpu.memory_space<vmem>>, vector<16x128xf32>
    %c0_40 = arith.constant 0 : index
    %c128_41 = arith.constant 128 : index
    %34 = vector.load %arg12[%c0_40, %c128_41] : memref<16x384xf32, #tpu.memory_space<vmem>>, vector<16x128xf32>
    tpu.vector_store %arg12[%c0_40, %c128_41], %33 {strides = array<i32>} : memref<16x384xf32, #tpu.memory_space<vmem>>, vector<16x128xf32>,
    %c1_42 = arith.constant 1 : index
    %c0_43 = arith.constant 0 : index
    %35 = tpu.strided_load %arg15[%c1_42, %c0_43] {strides = array<i32: 2, 1>} : memref<32x128xf32, #tpu.memory_space<vmem>>, vector<16x128xf32>
    %c0_44 = arith.constant 0 : index
    %c256 = arith.constant 256 : index
    %36 = vector.load %arg12[%c0_44, %c256] : memref<16x384xf32, #tpu.memory_space<vmem>>, vector<16x128xf32>
    tpu.vector_store %arg12[%c0_44, %c256], %35 {strides = array<i32>} : memref<16x384xf32, #tpu.memory_space<vmem>>, vector<16x128xf32>,
    %c0_45 = arith.constant 0 : index
    %c0_46 = arith.constant 0 : index
    %37 = vector.load %arg12[%c0_45, %c0_46] : memref<16x384xf32, #tpu.memory_space<vmem>>, vector<16x384xf32>
    %38 = arith.truncf %37 : vector<16x384xf32> to vector<16x384xbf16>
    %c0_47 = arith.constant 0 : index
    %c0_48 = arith.constant 0 : index
    %39 = vector.load %arg3[%c0_47, %c0_48] : memref<384x128xbf16, #tpu.memory_space<vmem>>, vector<384x128xbf16>
    %cst_49 = arith.constant dense<0.000000e+00> : vector<16x128xf32>
    %40 = tpu.matmul %38, %39, %cst_49 {dimension_numbers = #tpu.dot_dimension_numbers<[1], [0], [0], [1], [0, 0, 1, 1], [], []>} : vector<16x384xbf16>, vector<384x128xbf16>, vector<16x128xf32> -> vector<16x128xf32>
    %c0_50 = arith.constant 0 : index
    %c0_51 = arith.constant 0 : index
    %41 = vector.load %arg4[%c0_50, %c0_51] : memref<2x128xf32, #tpu.memory_space<vmem>>, vector<1x128xf32>
    %42 = vector.broadcast %41 : vector<1x128xf32> to vector<16x128xf32>
    %43 = arith.mulf %40, %42 : vector<16x128xf32>
    %c1_52 = arith.constant 1 : index
    %c0_53 = arith.constant 0 : index
    %44 = vector.load %arg4[%c1_52, %c0_53] : memref<2x128xf32, #tpu.memory_space<vmem>>, vector<1x128xf32>
    %45 = vector.broadcast %44 : vector<1x128xf32> to vector<16x128xf32>
    %46 = arith.addf %43, %45 : vector<16x128xf32>
    %cst_54 = arith.constant 0.000000e+00 : f32
    %47 = vector.broadcast %cst_54 : f32 to vector<16x128xf32>
    %48 = arith.maximumf %46, %47 : vector<16x128xf32>
    %c0_55 = arith.constant 0 : index
    %c0_56 = arith.constant 0 : index
    %49 = vector.load %arg16[%c0_55, %c0_56] : memref<16x128xf32, #tpu.memory_space<vmem>>, vector<16x128xf32>
    tpu.vector_store %arg16[%c0_55, %c0_56], %48 {strides = array<i32>} : memref<16x128xf32, #tpu.memory_space<vmem>>, vector<16x128xf32>,
    %cst_57 = arith.constant 0.000000e+00 : f32
    %50 = vector.broadcast %cst_57 : f32 to vector<1x128xf32>
    %c0_58 = arith.constant 0 : index
    %c0_59 = arith.constant 0 : index
    %51 = vector.load %arg13[%c0_58, %c0_59] : memref<8x384xf32, #tpu.memory_space<vmem>>, vector<1x128xf32>
    tpu.vector_store %arg13[%c0_58, %c0_59], %50 {strides = array<i32>} : memref<8x384xf32, #tpu.memory_space<vmem>>, vector<1x128xf32>,
    %c1_60 = arith.constant 1 : index
    %c0_61 = arith.constant 0 : index
    %52 = tpu.strided_load %arg16[%c1_60, %c0_61] {strides = array<i32: 2, 1>} : memref<16x128xf32, #tpu.memory_space<vmem>>, vector<3x128xf32>
    %c1_62 = arith.constant 1 : index
    %c0_63 = arith.constant 0 : index
    %53 = vector.load %arg13[%c1_62, %c0_63] : memref<8x384xf32, #tpu.memory_space<vmem>>, vector<3x128xf32>
    tpu.vector_store %arg13[%c1_62, %c0_63], %52 {strides = array<i32>} : memref<8x384xf32, #tpu.memory_space<vmem>>, vector<3x128xf32>,
    %cst_64 = arith.constant 0.000000e+00 : f32
    %54 = vector.broadcast %cst_64 : f32 to vector<1x128xf32>
    %c4 = arith.constant 4 : index
    %c0_65 = arith.constant 0 : index
    %55 = vector.load %arg13[%c4, %c0_65] : memref<8x384xf32, #tpu.memory_space<vmem>>, vector<1x128xf32>
    tpu.vector_store %arg13[%c4, %c0_65], %54 {strides = array<i32>} : memref<8x384xf32, #tpu.memory_space<vmem>>, vector<1x128xf32>,
    %c9_66 = arith.constant 9 : index
    %c0_67 = arith.constant 0 : index
    %56 = tpu.strided_load %arg16[%c9_66, %c0_67] {strides = array<i32: 2, 1>} : memref<16x128xf32, #tpu.memory_space<vmem>>, vector<3x128xf32>
    %c5 = arith.constant 5 : index
    %c0_68 = arith.constant 0 : index
    %57 = vector.load %arg13[%c5, %c0_68] : memref<8x384xf32, #tpu.memory_space<vmem>>, vector<3x128xf32>
    tpu.vector_store %arg13[%c5, %c0_68], %56 {strides = array<i32>} : memref<8x384xf32, #tpu.memory_space<vmem>>, vector<3x128xf32>,
    %c0_69 = arith.constant 0 : index
    %c0_70 = arith.constant 0 : index
    %58 = tpu.strided_load %arg16[%c0_69, %c0_70] {strides = array<i32: 2, 1>} : memref<16x128xf32, #tpu.memory_space<vmem>>, vector<8x128xf32>
    %c0_71 = arith.constant 0 : index
    %c128_72 = arith.constant 128 : index
    %59 = vector.load %arg13[%c0_71, %c128_72] : memref<8x384xf32, #tpu.memory_space<vmem>>, vector<8x128xf32>
    tpu.vector_store %arg13[%c0_71, %c128_72], %58 {strides = array<i32>} : memref<8x384xf32, #tpu.memory_space<vmem>>, vector<8x128xf32>,
    %c1_73 = arith.constant 1 : index
    %c0_74 = arith.constant 0 : index
    %60 = tpu.strided_load %arg16[%c1_73, %c0_74] {strides = array<i32: 2, 1>} : memref<16x128xf32, #tpu.memory_space<vmem>>, vector<8x128xf32>
    %c0_75 = arith.constant 0 : index
    %c256_76 = arith.constant 256 : index
    %61 = vector.load %arg13[%c0_75, %c256_76] : memref<8x384xf32, #tpu.memory_space<vmem>>, vector<8x128xf32>
    tpu.vector_store %arg13[%c0_75, %c256_76], %60 {strides = array<i32>} : memref<8x384xf32, #tpu.memory_space<vmem>>, vector<8x128xf32>,
    %c0_77 = arith.constant 0 : index
    %c0_78 = arith.constant 0 : index
    %62 = vector.load %arg13[%c0_77, %c0_78] : memref<8x384xf32, #tpu.memory_space<vmem>>, vector<8x384xf32>
    %63 = arith.truncf %62 : vector<8x384xf32> to vector<8x384xbf16>
    %c0_79 = arith.constant 0 : index
    %c0_80 = arith.constant 0 : index
    %64 = vector.load %arg5[%c0_79, %c0_80] : memref<384x64xbf16, #tpu.memory_space<vmem>>, vector<384x64xbf16>
    %cst_81 = arith.constant dense<0.000000e+00> : vector<8x64xf32>
    %65 = tpu.matmul %63, %64, %cst_81 {dimension_numbers = #tpu.dot_dimension_numbers<[1], [0], [0], [1], [0, 0, 1, 1], [], []>} : vector<8x384xbf16>, vector<384x64xbf16>, vector<8x64xf32> -> vector<8x64xf32>
    %c0_82 = arith.constant 0 : index
    %c0_83 = arith.constant 0 : index
    %66 = vector.load %arg6[%c0_82, %c0_83] : memref<2x64xf32, #tpu.memory_space<vmem>>, vector<1x64xf32>
    %67 = vector.broadcast %66 : vector<1x64xf32> to vector<8x64xf32>
    %68 = arith.mulf %65, %67 : vector<8x64xf32>
    %c1_84 = arith.constant 1 : index
    %c0_85 = arith.constant 0 : index
    %69 = vector.load %arg6[%c1_84, %c0_85] : memref<2x64xf32, #tpu.memory_space<vmem>>, vector<1x64xf32>
    %70 = vector.broadcast %69 : vector<1x64xf32> to vector<8x64xf32>
    %71 = arith.addf %68, %70 : vector<8x64xf32>
    %cst_86 = arith.constant 0.000000e+00 : f32
    %72 = vector.broadcast %cst_86 : f32 to vector<8x64xf32>
    %73 = arith.maximumf %71, %72 : vector<8x64xf32>
    %c0_87 = arith.constant 0 : index
    %c0_88 = arith.constant 0 : index
    %74 = vector.load %arg17[%c0_87, %c0_88] : memref<8x64xf32, #tpu.memory_space<vmem>>, vector<8x64xf32>
    tpu.vector_store %arg17[%c0_87, %c0_88], %73 {strides = array<i32>} : memref<8x64xf32, #tpu.memory_space<vmem>>, vector<8x64xf32>,
    %cst_89 = arith.constant 0.000000e+00 : f32
    %75 = vector.broadcast %cst_89 : f32 to vector<1x64xf32>
    %c0_90 = arith.constant 0 : index
    %c0_91 = arith.constant 0 : index
    %76 = vector.load %arg14[%c0_90, %c0_91] : memref<4x192xf32, #tpu.memory_space<vmem>>, vector<1x64xf32>
    tpu.vector_store %arg14[%c0_90, %c0_91], %75 {strides = array<i32>} : memref<4x192xf32, #tpu.memory_space<vmem>>, vector<1x64xf32>,
    %c1_92 = arith.constant 1 : index
    %c0_93 = arith.constant 0 : index
    %77 = tpu.strided_load %arg17[%c1_92, %c0_93] {strides = array<i32: 2, 1>} : memref<8x64xf32, #tpu.memory_space<vmem>>, vector<1x64xf32>
    %c1_94 = arith.constant 1 : index
    %c0_95 = arith.constant 0 : index
    %78 = vector.load %arg14[%c1_94, %c0_95] : memref<4x192xf32, #tpu.memory_space<vmem>>, vector<1x64xf32>
    tpu.vector_store %arg14[%c1_94, %c0_95], %77 {strides = array<i32>} : memref<4x192xf32, #tpu.memory_space<vmem>>, vector<1x64xf32>,
    %cst_96 = arith.constant 0.000000e+00 : f32
    %79 = vector.broadcast %cst_96 : f32 to vector<1x64xf32>
    %c2 = arith.constant 2 : index
    %c0_97 = arith.constant 0 : index
    %80 = vector.load %arg14[%c2, %c0_97] : memref<4x192xf32, #tpu.memory_space<vmem>>, vector<1x64xf32>
    tpu.vector_store %arg14[%c2, %c0_97], %79 {strides = array<i32>} : memref<4x192xf32, #tpu.memory_space<vmem>>, vector<1x64xf32>,
    %c5_98 = arith.constant 5 : index
    %c0_99 = arith.constant 0 : index
    %81 = tpu.strided_load %arg17[%c5_98, %c0_99] {strides = array<i32: 2, 1>} : memref<8x64xf32, #tpu.memory_space<vmem>>, vector<1x64xf32>
    %c3 = arith.constant 3 : index
    %c0_100 = arith.constant 0 : index
    %82 = vector.load %arg14[%c3, %c0_100] : memref<4x192xf32, #tpu.memory_space<vmem>>, vector<1x64xf32>
    tpu.vector_store %arg14[%c3, %c0_100], %81 {strides = array<i32>} : memref<4x192xf32, #tpu.memory_space<vmem>>, vector<1x64xf32>,
    %c0_101 = arith.constant 0 : index
    %c0_102 = arith.constant 0 : index
    %83 = tpu.strided_load %arg17[%c0_101, %c0_102] {strides = array<i32: 2, 1>} : memref<8x64xf32, #tpu.memory_space<vmem>>, vector<4x64xf32>
    %c0_103 = arith.constant 0 : index
    %c64_104 = arith.constant 64 : index
    %84 = vector.load %arg14[%c0_103, %c64_104] : memref<4x192xf32, #tpu.memory_space<vmem>>, vector<4x64xf32>
    tpu.vector_store %arg14[%c0_103, %c64_104], %83 {strides = array<i32>} : memref<4x192xf32, #tpu.memory_space<vmem>>, vector<4x64xf32>,
    %c1_105 = arith.constant 1 : index
    %c0_106 = arith.constant 0 : index
    %85 = tpu.strided_load %arg17[%c1_105, %c0_106] {strides = array<i32: 2, 1>} : memref<8x64xf32, #tpu.memory_space<vmem>>, vector<4x64xf32>
    %c0_107 = arith.constant 0 : index
    %c128_108 = arith.constant 128 : index
    %86 = vector.load %arg14[%c0_107, %c128_108] : memref<4x192xf32, #tpu.memory_space<vmem>>, vector<4x64xf32>
    tpu.vector_store %arg14[%c0_107, %c128_108], %85 {strides = array<i32>} : memref<4x192xf32, #tpu.memory_space<vmem>>, vector<4x64xf32>,
    %c0_109 = arith.constant 0 : index
    %c0_110 = arith.constant 0 : index
    %87 = vector.load %arg14[%c0_109, %c0_110] : memref<4x192xf32, #tpu.memory_space<vmem>>, vector<4x192xf32>
    %88 = arith.truncf %87 : vector<4x192xf32> to vector<4x192xbf16>
    %c0_111 = arith.constant 0 : index
    %c0_112 = arith.constant 0 : index
    %89 = vector.load %arg7[%c0_111, %c0_112] : memref<192x64xbf16, #tpu.memory_space<vmem>>, vector<192x64xbf16>
    %cst_113 = arith.constant dense<0.000000e+00> : vector<4x64xf32>
    %90 = tpu.matmul %88, %89, %cst_113 {dimension_numbers = #tpu.dot_dimension_numbers<[1], [0], [0], [1], [0, 0, 1, 1], [], []>} : vector<4x192xbf16>, vector<192x64xbf16>, vector<4x64xf32> -> vector<4x64xf32>
    %c0_114 = arith.constant 0 : index
    %c0_115 = arith.constant 0 : index
    %91 = vector.load %arg8[%c0_114, %c0_115] : memref<2x64xf32, #tpu.memory_space<vmem>>, vector<1x64xf32>
    %92 = vector.broadcast %91 : vector<1x64xf32> to vector<4x64xf32>
    %93 = arith.mulf %90, %92 : vector<4x64xf32>
    %c1_116 = arith.constant 1 : index
    %c0_117 = arith.constant 0 : index
    %94 = vector.load %arg8[%c1_116, %c0_117] : memref<2x64xf32, #tpu.memory_space<vmem>>, vector<1x64xf32>
    %95 = vector.broadcast %94 : vector<1x64xf32> to vector<4x64xf32>
    %96 = arith.addf %93, %95 : vector<4x64xf32>
    %cst_118 = arith.constant 0.000000e+00 : f32
    %97 = vector.broadcast %cst_118 : f32 to vector<4x64xf32>
    %98 = arith.maximumf %96, %97 : vector<4x64xf32>
    %99 = arith.truncf %98 : vector<4x64xf32> to vector<4x64xbf16>
    %c0_119 = arith.constant 0 : index
    %c0_120 = arith.constant 0 : index
    %100 = vector.load %arg9[%c0_119, %c0_120] : memref<64x128xbf16, #tpu.memory_space<vmem>>, vector<64x128xbf16>
    %cst_121 = arith.constant dense<0.000000e+00> : vector<4x128xf32>
    %101 = tpu.matmul %99, %100, %cst_121 {dimension_numbers = #tpu.dot_dimension_numbers<[1], [0], [0], [1], [0, 0, 1, 1], [], []>} : vector<4x64xbf16>, vector<64x128xbf16>, vector<4x128xf32> -> vector<4x128xf32>
    %c0_122 = arith.constant 0 : index
    %c0_123 = arith.constant 0 : index
    %102 = vector.load %arg10[%c0_122, %c0_123] : memref<4x128xf32, #tpu.memory_space<vmem>>, vector<4x128xf32>
    tpu.vector_store %arg10[%c0_122, %c0_123], %101 {strides = array<i32>} : memref<4x128xf32, #tpu.memory_space<vmem>>, vector<4x128xf32>,
    return
  }
}

</mosaic_0001>

<llo_original>
// kernel: tpu_custom_call.1
$region0: #{tpu_custom_call.1}
  #allocation0 [shape = 'u32[]', space=smem, size = 0x4, offset = 0x4, fixed_abs, tag = 'smem constant byte address 0x4 - core index']
  #allocation1 [shape = 'u32[144,128]{1,0:T(1,128)}', space=vmem, size = 0x12000, scoped, tag = 'internal scratch']
  #allocation2 [shape = 'f32[32,192]{1,0:T(8,128)}', space=vmem, size = 0x8000, scoped, tag = 'scratch operand']
  #allocation3 [shape = 'f32[16,384]{1,0:T(8,128)}', space=vmem, size = 0x6000, scoped, tag = 'scratch operand']
  #allocation4 [shape = 'f32[8,384]{1,0:T(8,128)}', space=vmem, size = 0x3000, scoped, tag = 'scratch operand']
  #allocation5 [shape = 'f32[4,192]{1,0:T(4,128)}', space=vmem, size = 0x1000, scoped, tag = 'scratch operand']
  #allocation6 [shape = 'f32[32,128]{1,0:T(8,128)}', space=vmem, size = 0x4000, scoped, tag = 'scratch operand']
  #allocation7 [shape = 'f32[16,128]{1,0:T(8,128)}', space=vmem, size = 0x2000, scoped, tag = 'scratch operand']
  #allocation8 [shape = 'f32[8,64]{1,0:T(8,128)}', space=vmem, size = 0x1000, scoped, tag = 'scratch operand']
  %s0 = inlined_call_operand.vmem [shape: f32[64,64], index: 0, kind: input, shape index: {}]
  %s1 = inlined_call_operand.vmem [shape: bf16[192,128], index: 1, kind: input, shape index: {}]
  %s2 = inlined_call_operand.vmem [shape: f32[2,128], index: 2, kind: input, shape index: {}]
  %s3 = inlined_call_operand.vmem [shape: bf16[384,128], index: 3, kind: input, shape index: {}]
  %s4 = inlined_call_operand.vmem [shape: f32[2,128], index: 4, kind: input, shape index: {}]
  %s5 = inlined_call_operand.vmem [shape: bf16[384,64], index: 5, kind: input, shape index: {}]
  %s6 = inlined_call_operand.vmem [shape: f32[2,64], index: 6, kind: input, shape index: {}]
  %s7 = inlined_call_operand.vmem [shape: bf16[192,64], index: 7, kind: input, shape index: {}]
  %s8 = inlined_call_operand.vmem [shape: f32[2,64], index: 8, kind: input, shape index: {}]
  %s9 = inlined_call_operand.hbm [shape: bf16[64,128], index: 9, kind: input, shape index: {}]
  %s10 = inlined_call_operand.hbm [shape: f32[4,128], index: 10, kind: output, shape index: {}]
  %s11 = sld [smem:[#allocation0]]
  $region54: #{tpu_custom_call.1} parent=0
    _
  %s13 = ssub.s32 1, %s11
  %s14 = scalar_select 0, %s13, %s11
  $region1: #{tpu_custom_call.1} parent=0
    #allocation9 [shape = 'u8[16384]{0}', space=vmem, size = 0x4000, scoped, tag = 'input window, operand 9, single buffered']
    #allocation10 [shape = 's32[1]{0}', space=sflag, size = 0x4, scoped, tag = 'scoped memory for tpu_custom_call.1']
    #allocation11 [shape = 's32[1]{0}', space=sflag, size = 0x4, scoped, tag = 'scoped memory for tpu_custom_call.1']
    #allocation12 [shape = 'u8[2048]{0}', space=vmem, size = 0x800, scoped, tag = 'output window, operand 0, single buffered']
    %15 = vsyncpa [#allocation10], 0
    %16 = vsyncpa [#allocation11], 0
    // Predicated region
    $region2: #{tpu_custom_call.1} parent=1 // pred_check
      _
    $region3: #{tpu_custom_call.1} parent=1 // pred_check_branch
      %18 = sbr.rel (0) target = $region5
    $region4: #{tpu_custom_call.1} parent=1 // pred_region
      _
    $region5: #{tpu_custom_call.1} parent=1 // pred_fallthru
      _
    // Predicated region
    $region6: #{tpu_custom_call.1} parent=1 // pred_check
      _
    $region7: #{tpu_custom_call.1} parent=1 // pred_check_branch
      %20 = sbr.rel (0) target = $region9
    $region8: #{tpu_custom_call.1} parent=1 // pred_region
      _
    $region9: #{tpu_custom_call.1} parent=1 // pred_fallthru
      _
    // Predicated region
    $region10: #{tpu_custom_call.1} parent=1 // pred_check
      _
    $region11: #{tpu_custom_call.1} parent=1 // pred_check_branch
      %22 = sbr.rel (0) target = $region13
    $region12: #{tpu_custom_call.1} parent=1 // pred_region
      _
    $region13: #{tpu_custom_call.1} parent=1 // pred_fallthru
      _
    // Predicated region
    $region14: #{tpu_custom_call.1} parent=1 // pred_check
      _
    $region15: #{tpu_custom_call.1} parent=1 // pred_check_branch
      %24 = sbr.rel (0) target = $region17
    $region16: #{tpu_custom_call.1} parent=1 // pred_region
      _
    $region17: #{tpu_custom_call.1} parent=1 // pred_fallthru
      _
    // Predicated region
    $region18: #{tpu_custom_call.1} parent=1 // pred_check
      _
    $region19: #{tpu_custom_call.1} parent=1 // pred_check_branch
      %26 = sbr.rel (0) target = $region21
    $region20: #{tpu_custom_call.1} parent=1 // pred_region
      _
    $region21: #{tpu_custom_call.1} parent=1 // pred_fallthru
      _
    // Predicated region
    $region22: #{tpu_custom_call.1} parent=1 // pred_check
      _
    $region23: #{tpu_custom_call.1} parent=1 // pred_check_branch
      %28 = sbr.rel (0) target = $region25
    $region24: #{tpu_custom_call.1} parent=1 // pred_region
      _
    $region25: #{tpu_custom_call.1} parent=1 // pred_fallthru
      _
    // Predicated region
    $region26: #{tpu_custom_call.1} parent=1 // pred_check
      _
    $region27: #{tpu_custom_call.1} parent=1 // pred_check_branch
      %30 = sbr.rel (0) target = $region29
    $region28: #{tpu_custom_call.1} parent=1 // pred_region
      _
    $region29: #{tpu_custom_call.1} parent=1 // pred_fallthru
      _
    // Predicated region
    $region30: #{tpu_custom_call.1} parent=1 // pred_check
      _
    $region31: #{tpu_custom_call.1} parent=1 // pred_check_branch
      %32 = sbr.rel (0) target = $region33
    $region32: #{tpu_custom_call.1} parent=1 // pred_region
      _
    $region33: #{tpu_custom_call.1} parent=1 // pred_fallthru
      _
    // Predicated region
    $region34: #{tpu_custom_call.1} parent=1 // pred_check
      _
    $region35: #{tpu_custom_call.1} parent=1 // pred_check_branch
      %34 = sbr.rel (0) target = $region37
    $region36: #{tpu_custom_call.1} parent=1 // pred_region
      _
    $region37: #{tpu_custom_call.1} parent=1 // pred_fallthru
      _
    // Predicated region
    $region38: #{tpu_custom_call.1} parent=1 // pred_check
      _
    $region39: #{tpu_custom_call.1} parent=1 // pred_check_branch
      %36 = sbr.rel (0) target = $region41
    $region40: #{tpu_custom_call.1} parent=1 // pred_region
      %s38 = ssub.s32 512, 512
      %39 = vsyncadd [#allocation10], %s38
      %s40 = sshll.u32 [#allocation9], 4
      %s41 = int_to_ptr.vmem [resolvable:$true] %s40
      %46 = dma.hbm_to_vmem [thread:$0]  %s9, 512, %s41, [#allocation10], 64, 64, 4
    $region41: #{tpu_custom_call.1} parent=1 // pred_fallthru
      _
    // Predicated region
    $region42: #{tpu_custom_call.1} parent=1 // pred_check
      _
    $region43: #{tpu_custom_call.1} parent=1 // pred_check_branch
      %48 = sbr.rel (0) target = $region45
    $region44: #{tpu_custom_call.1} parent=1 // pred_region
      %49 = dma.done [#allocation10], 512
    $region45: #{tpu_custom_call.1} parent=1 // pred_fallthru
      _
    %vm51 = vcmask 516096
    %52 = vst.msk [vmem:[#allocation2] sm:$0x1] %vm51, 0.0
    %s53 = scalar_lea.vmem %s0, 1
    %v54 = vld [vmem:[%s53] ss:$2 sm:$0xff]
    %s55 = scalar_lea.vmem %s0, 17
    %v56 = vld [vmem:[%s55] ss:$2 sm:$0x7f]
    %vm59 = vcmask 1040384
    %v60 = vrot.slane %v54, 7
    %v61 = vrot.slane %v56, 7
    %v62 = vsel %vm59, %v60, %v61
    %vm65 = vcmask 523265
    %66 = vst.msk [vmem:[#allocation2] sm:$0xfe] %vm65, %v60
    %vm67 = vcmask 523264
    %68 = vst.msk [vmem:[#allocation2 + $0x10] sm:$0xff] %vm67, %v62
    %69 = vst.msk [vmem:[#allocation2 + $0x20] sm:$0x1] %vm51, 0.0
    %s70 = scalar_lea.vmem %s0, 33
    %v71 = vld [vmem:[%s70] ss:$2 sm:$0xff]
    %s72 = scalar_lea.vmem %s0, 49
    %v73 = vld [vmem:[%s72] ss:$2 sm:$0x7f]
    %v76 = vrot.slane %v71, 7
    %v77 = vrot.slane %v73, 7
    %v78 = vsel %vm59, %v76, %v77
    %81 = vst.msk [vmem:[#allocation2 + $0x20] sm:$0xfe] %vm65, %v76
    %82 = vst.msk [vmem:[#allocation2 + $0x30] sm:$0xff] %vm67, %v78
    %v83 = vld [vmem:[%s0] ss:$2 sm:$0xff]
    %s84 = scalar_lea.vmem %s0, 16
    %v85 = vld [vmem:[%s84] ss:$2 sm:$0xff]
    %s86 = scalar_lea.vmem %s0, 32
    %v87 = vld [vmem:[%s86] ss:$2 sm:$0xff]
    %s88 = scalar_lea.vmem %s0, 48
    %v89 = vld [vmem:[%s88] ss:$2 sm:$0xff]
    %94 = vrot.lane.b32.xlu0 %v83, 64
    %v95 = vpop.permute.xlu0 %94
    %96 = vrot.lane.b32.xlu0 %v85, 64
    %v97 = vpop.permute.xlu0 %96
    %98 = vrot.lane.b32.xlu0 %v87, 64
    %v99 = vpop.permute.xlu0 %98
    %100 = vrot.lane.b32.xlu0 %v89, 64
    %v101 = vpop.permute.xlu0 %100
    %vm106 = vcmask 1048064
    %107 = vst.msk [vmem:[#allocation2] sm:$0xff] %vm106, %v95
    %108 = vst.msk [vmem:[#allocation2 + $0x10] sm:$0xff] %vm106, %v97
    %109 = vst.msk [vmem:[#allocation2 + $0x20] sm:$0xff] %vm106, %v99
    %110 = vst.msk [vmem:[#allocation2 + $0x30] sm:$0xff] %vm106, %v101
    %v111 = vld [vmem:[%s53] ss:$2 sm:$0xff]
    %v112 = vld [vmem:[%s55] ss:$2 sm:$0xff]
    %v113 = vld [vmem:[%s70] ss:$2 sm:$0xff]
    %v114 = vld [vmem:[%s72] ss:$2 sm:$0xff]
    %115 = vst.msk [vmem:[#allocation2 + $0x8] sm:$0xff] %vm67, %v111
    %116 = vst.msk [vmem:[#allocation2 + $0x18] sm:$0xff] %vm67, %v112
    %117 = vst.msk [vmem:[#allocation2 + $0x28] sm:$0xff] %vm67, %v113
    %118 = vst.msk [vmem:[#allocation2 + $0x38] sm:$0xff] %vm67, %v114
    %v119 = vld [vmem:[#allocation2] sm:$0xff]
    %v120 = vld [vmem:[#allocation2 + $0x8] sm:$0xff]
    %v121 = vld [vmem:[#allocation2 + $0x10] sm:$0xff]
    %v122 = vld [vmem:[#allocation2 + $0x18] sm:$0xff]
    %v123 = vld [vmem:[#allocation2 + $0x20] sm:$0xff]
    %v124 = vld [vmem:[#allocation2 + $0x28] sm:$0xff]
    %v125 = vld [vmem:[#allocation2 + $0x30] sm:$0xff]
    %v126 = vld [vmem:[#allocation2 + $0x38] sm:$0xff]
    %v127 = vpack.c.bf16 %v121, %v119
    %v128 = vpack.c.bf16 %v122, %v120
    %v129 = vpack.c.bf16 %v125, %v123
    %v130 = vpack.c.bf16 %v126, %v124
    %v131 = vld [vmem:[%s1] sm:$0xf]
    %v132 = vld [vmem:[%s1 + $0x4] sm:$0xf]
    %v133 = vld [vmem:[%s1 + $0x8] sm:$0xf]
    %v134 = vld [vmem:[%s1 + $0xc] sm:$0xf]
    %v135 = vld [vmem:[%s1 + $0x10] sm:$0xf]
    %v136 = vld [vmem:[%s1 + $0x14] sm:$0xf]
    %v137 = vld [vmem:[%s1 + $0x18] sm:$0xf]
    %v138 = vld [vmem:[%s1 + $0x1c] sm:$0xf]
    %v139 = vld [vmem:[%s1 + $0x20] sm:$0xf]
    %v140 = vld [vmem:[%s1 + $0x24] sm:$0xf]
    %v141 = vld [vmem:[%s1 + $0x28] sm:$0xf]
    %v142 = vld [vmem:[%s1 + $0x2c] sm:$0xf]
    %v143 = vld [vmem:[%s1 + $0x30] sm:$0xf]
    %v144 = vld [vmem:[%s1 + $0x34] sm:$0xf]
    %v145 = vld [vmem:[%s1 + $0x38] sm:$0xf]
    %v146 = vld [vmem:[%s1 + $0x3c] sm:$0xf]
    %v147 = vld [vmem:[%s1 + $0x40] sm:$0xf]
    %v148 = vld [vmem:[%s1 + $0x44] sm:$0xf]
    %v149 = vld [vmem:[%s1 + $0x48] sm:$0xf]
    %v150 = vld [vmem:[%s1 + $0x4c] sm:$0xf]
    %v151 = vld [vmem:[%s1 + $0x50] sm:$0xf]
    %v152 = vld [vmem:[%s1 + $0x54] sm:$0xf]
    %v153 = vld [vmem:[%s1 + $0x58] sm:$0xf]
    %v154 = vld [vmem:[%s1 + $0x5c] sm:$0xf]
    %v179 = vunpack.c.l.b16 %v131
    %v180 = vunpack.c.l.b16 %v132
    %v181 = vunpack.c.l.b16 %v133
    %v182 = vunpack.c.l.b16 %v134
    %v183 = vunpack.c.l.b16 %v135
    %v184 = vunpack.c.l.b16 %v136
    %v185 = vunpack.c.l.b16 %v137
    %v186 = vunpack.c.l.b16 %v138
    %v187 = vunpack.c.l.b16 %v139
    %v188 = vunpack.c.l.b16 %v140
    %v189 = vunpack.c.l.b16 %v141
    %v190 = vunpack.c.l.b16 %v142
    %v191 = vunpack.c.l.b16 %v143
    %v192 = vunpack.c.l.b16 %v144
    %v193 = vunpack.c.l.b16 %v145
    %v194 = vunpack.c.l.b16 %v146
    %v195 = vunpack.c.l.b16 %v147
    %v196 = vunpack.c.l.b16 %v148
    %v197 = vunpack.c.l.b16 %v149
    %v198 = vunpack.c.l.b16 %v150
    %v199 = vunpack.c.l.b16 %v151
    %v200 = vunpack.c.l.b16 %v152
    %v201 = vunpack.c.l.b16 %v153
    %v202 = vunpack.c.l.b16 %v154
    %v203 = vpack.c.b16 %v180, %v179
    %v204 = vpack.c.b16 %v182, %v181
    %v205 = vpack.c.b16 %v184, %v183
    %v206 = vpack.c.b16 %v186, %v185
    %v207 = vpack.c.b16 %v188, %v187
    %v208 = vpack.c.b16 %v190, %v189
    %v209 = vpack.c.b16 %v192, %v191
    %v210 = vpack.c.b16 %v194, %v193
    %v211 = vpack.c.b16 %v196, %v195
    %v212 = vpack.c.b16 %v198, %v197
    %v213 = vpack.c.b16 %v200, %v199
    %v214 = vpack.c.b16 %v202, %v201
    %v228 = vsel %vm67, %v128, 0
    %v231 = vsel %vm67, %v130, 0
    %233 = vmatprep.subr.bf16.mxu0 0
    %234 = vmatpush1.bf16.msra.mxu0 %v203
    %235 = vmatprep.subr.bf16.mxu0 0
    %236 = vmatpush1.bf16.msra.mxu0 %v204
    %237 = vmatprep.subr.bf16.mxu0 0
    %238 = vmatpush1.bf16.msra.mxu0 %v205
    %239 = vmatprep.subr.bf16.mxu0 0
    %240 = vmatpush1.bf16.msra.mxu0 %v206
    %241 = vmatprep.subr.bf16.mxu0 0
    %242 = vmatpush1.bf16.msra.mxu0 %v207
    %243 = vmatprep.subr.bf16.mxu0 0
    %244 = vmatpush1.bf16.msra.mxu0 %v208
    %245 = vmatprep.subr.bf16.mxu0 0
    %246 = vmatpush1.bf16.msra.mxu0 %v209
    %247 = vmatprep.subr.bf16.mxu0 0
    %248 = vmatpush1.bf16.msra.mxu0 %v210
    %249 = vmatprep.subr.bf16.mxu0 0
    %250 = vmatpush1.bf16.msra.mxu0 %v211
    %251 = vmatprep.subr.bf16.mxu0 0
    %252 = vmatpush1.bf16.msra.mxu0 %v212
    %253 = vmatprep.subr.bf16.mxu0 0
    %254 = vmatpush1.bf16.msra.mxu0 %v213
    %255 = vmatprep.subr.bf16.mxu0 0
    %256 = vmatpush1.bf16.msra.mxu0 %v214
    %257 = vmatprep.subr.bf16.mxu0 0
    %258 = vmatpush1.bf16.msra.mxu0 0
    %259 = vmatprep.subr.bf16.mxu0 0
    %260 = vmatpush1.bf16.msra.mxu0 0
    %261 = vmatprep.subr.bf16.mxu0 0
    %262 = vmatpush1.bf16.msra.mxu0 0
    %263 = vmatprep.subr.bf16.mxu0 0
    %264 = vmatpush1.bf16.msra.mxu0 0
    %265 = vmatprep.mubr.bf16.mxu0 %v228
    %266 = vmatmul.mubr.bf16.gmra.mrb[0].mxu0 %v127
    %v267 = vpop.f32.mrb[0].mxu0
    %v268 = vadd.f32 0.0, %v267
    %v269 = vpop.f32.mrb[0].mxu0
    %v270 = vpop.f32.mrb[0].mxu0
    %v271 = vadd.f32 0.0, %v270
    %v272 = vpop.f32.mrb[0].mxu0
    %273 = vmatprep.mubr.bf16.mxu0 %v231
    %274 = vmatmul.mubr.bf16.gmra.mrb[0].mxu0 %v129
    %v275 = vpop.f32.mrb[0].mxu0
    %v276 = vadd.f32 0.0, %v275
    %v277 = vpop.f32.mrb[0].mxu0
    %v278 = vpop.f32.mrb[0].mxu0
    %v279 = vadd.f32 0.0, %v278
    %v280 = vpop.f32.mrb[0].mxu0
    %281 = vdwg.mxu0
    %v282 = vld [vmem:[%s2] sm:$0x1]
    %v283 = vlaneseq
    %v284 = vshrl.u32 %v283, 7
    %v285 = vsub.s32 0, %v284
    %v286 = vrot.slane %v282, %v285
    %v287 = vmul.f32 %v268, %v286
    %v288 = vmul.f32 %v271, %v286
    %v289 = vmul.f32 %v276, %v286
    %v290 = vmul.f32 %v279, %v286
    %v291 = vld [vmem:[%s2 + $0x1] sm:$0x1]
    %v292 = vlaneseq
    %v293 = vshrl.u32 %v292, 7
    %v294 = vsub.s32 0, %v293
    %v295 = vrot.slane %v291, %v294
    %v296 = vadd.f32 %v287, %v295
    %v297 = vadd.f32 %v288, %v295
    %v298 = vadd.f32 %v289, %v295
    %v299 = vadd.f32 %v290, %v295
    %v300 = vmax.f32 %v296, 0.0
    %v301 = vmax.f32 %v297, 0.0
    %v302 = vmax.f32 %v298, 0.0
    %v303 = vmax.f32 %v299, 0.0
    %304 = vst [vmem:[#allocation6] sm:$0xff] %v300
    %305 = vst [vmem:[#allocation6 + $0x8] sm:$0xff] %v301
    %306 = vst [vmem:[#allocation6 + $0x10] sm:$0xff] %v302
    %307 = vst [vmem:[#allocation6 + $0x18] sm:$0xff] %v303
    %308 = vst [vmem:[#allocation3] sm:$0x1] 0.0
    %s309 = scalar_lea.vmem [#allocation6], 1
    %v310 = vld [vmem:[%s309] ss:$2 sm:$0x7f]
    %v312 = vrot.slane %v310, 7
    %314 = vst [vmem:[#allocation3] sm:$0xfe] %v312
    %315 = vst [vmem:[#allocation3 + $0x18] sm:$0x1] 0.0
    %s316 = scalar_lea.vmem [#allocation6], 17
    %v317 = vld [vmem:[%s316] ss:$2 sm:$0x7f]
    %v319 = vrot.slane %v317, 7
    %321 = vst [vmem:[#allocation3 + $0x18] sm:$0xfe] %v319
    %v322 = vld [vmem:[#allocation6] ss:$2 sm:$0xff]
    %s323 = scalar_lea.vmem [#allocation6], 16
    %v324 = vld [vmem:[%s323] ss:$2 sm:$0xff]
    %325 = vst [vmem:[#allocation3 + $0x8] sm:$0xff] %v322
    %326 = vst [vmem:[#allocation3 + $0x20] sm:$0xff] %v324
    %v327 = vld [vmem:[%s309] ss:$2 sm:$0xff]
    %v328 = vld [vmem:[%s316] ss:$2 sm:$0xff]
    %329 = vst [vmem:[#allocation3 + $0x10] sm:$0xff] %v327
    %330 = vst [vmem:[#allocation3 + $0x28] sm:$0xff] %v328
    %v331 = vld [vmem:[#allocation3] sm:$0xff]
    %v332 = vld [vmem:[#allocation3 + $0x8] sm:$0xff]
    %v333 = vld [vmem:[#allocation3 + $0x10] sm:$0xff]
    %v334 = vld [vmem:[#allocation3 + $0x18] sm:$0xff]
    %v335 = vld [vmem:[#allocation3 + $0x20] sm:$0xff]
    %v336 = vld [vmem:[#allocation3 + $0x28] sm:$0xff]
    %v337 = vpack.c.bf16 %v334, %v331
    %v338 = vpack.c.bf16 %v335, %v332
    %v339 = vpack.c.bf16 %v336, %v333
    %v340 = vld [vmem:[%s3] sm:$0xf]
    %v341 = vld [vmem:[%s3 + $0x4] sm:$0xf]
    %v342 = vld [vmem:[%s3 + $0x8] sm:$0xf]
    %v343 = vld [vmem:[%s3 + $0xc] sm:$0xf]
    %v344 = vld [vmem:[%s3 + $0x10] sm:$0xf]
    %v345 = vld [vmem:[%s3 + $0x14] sm:$0xf]
    %v346 = vld [vmem:[%s3 + $0x18] sm:$0xf]
    %v347 = vld [vmem:[%s3 + $0x1c] sm:$0xf]
    %v348 = vld [vmem:[%s3 + $0x20] sm:$0xf]
    %v349 = vld [vmem:[%s3 + $0x24] sm:$0xf]
    %v350 = vld [vmem:[%s3 + $0x28] sm:$0xf]
    %v351 = vld [vmem:[%s3 + $0x2c] sm:$0xf]
    %v352 = vld [vmem:[%s3 + $0x30] sm:$0xf]
    %v353 = vld [vmem:[%s3 + $0x34] sm:$0xf]
    %v354 = vld [vmem:[%s3 + $0x38] sm:$0xf]
    %v355 = vld [vmem:[%s3 + $0x3c] sm:$0xf]
    %v356 = vld [vmem:[%s3 + $0x40] sm:$0xf]
    %v357 = vld [vmem:[%s3 + $0x44] sm:$0xf]
    %v358 = vld [vmem:[%s3 + $0x48] sm:$0xf]
    %v359 = vld [vmem:[%s3 + $0x4c] sm:$0xf]
    %v360 = vld [vmem:[%s3 + $0x50] sm:$0xf]
    %v361 = vld [vmem:[%s3 + $0x54] sm:$0xf]
    %v362 = vld [vmem:[%s3 + $0x58] sm:$0xf]
    %v363 = vld [vmem:[%s3 + $0x5c] sm:$0xf]
    %v364 = vld [vmem:[%s3 + $0x60] sm:$0xf]
    %v365 = vld [vmem:[%s3 + $0x64] sm:$0xf]
    %v366 = vld [vmem:[%s3 + $0x68] sm:$0xf]
    %v367 = vld [vmem:[%s3 + $0x6c] sm:$0xf]
    %v368 = vld [vmem:[%s3 + $0x70] sm:$0xf]
    %v369 = vld [vmem:[%s3 + $0x74] sm:$0xf]
    %v370 = vld [vmem:[%s3 + $0x78] sm:$0xf]
    %v371 = vld [vmem:[%s3 + $0x7c] sm:$0xf]
    %v372 = vld [vmem:[%s3 + $0x80] sm:$0xf]
    %v373 = vld [vmem:[%s3 + $0x84] sm:$0xf]
    %v374 = vld [vmem:[%s3 + $0x88] sm:$0xf]
    %v375 = vld [vmem:[%s3 + $0x8c] sm:$0xf]
    %v376 = vld [vmem:[%s3 + $0x90] sm:$0xf]
    %v377 = vld [vmem:[%s3 + $0x94] sm:$0xf]
    %v378 = vld [vmem:[%s3 + $0x98] sm:$0xf]
    %v379 = vld [vmem:[%s3 + $0x9c] sm:$0xf]
    %v380 = vld [vmem:[%s3 + $0xa0] sm:$0xf]
    %v381 = vld [vmem:[%s3 + $0xa4] sm:$0xf]
    %v382 = vld [vmem:[%s3 + $0xa8] sm:$0xf]
    %v383 = vld [vmem:[%s3 + $0xac] sm:$0xf]
    %v384 = vld [vmem:[%s3 + $0xb0] sm:$0xf]
    %v385 = vld [vmem:[%s3 + $0xb4] sm:$0xf]
    %v386 = vld [vmem:[%s3 + $0xb8] sm:$0xf]
    %v387 = vld [vmem:[%s3 + $0xbc] sm:$0xf]
    %v436 = vunpack.c.l.b16 %v340
    %v437 = vunpack.c.l.b16 %v341
    %v438 = vunpack.c.l.b16 %v342
    %v439 = vunpack.c.l.b16 %v343
    %v440 = vunpack.c.l.b16 %v344
    %v441 = vunpack.c.l.b16 %v345
    %v442 = vunpack.c.l.b16 %v346
    %v443 = vunpack.c.l.b16 %v347
    %v444 = vunpack.c.l.b16 %v348
    %v445 = vunpack.c.l.b16 %v349
    %v446 = vunpack.c.l.b16 %v350
    %v447 = vunpack.c.l.b16 %v351
    %v448 = vunpack.c.l.b16 %v352
    %v449 = vunpack.c.l.b16 %v353
    %v450 = vunpack.c.l.b16 %v354
    %v451 = vunpack.c.l.b16 %v355
    %v452 = vunpack.c.l.b16 %v356
    %v453 = vunpack.c.l.b16 %v357
    %v454 = vunpack.c.l.b16 %v358
    %v455 = vunpack.c.l.b16 %v359
    %v456 = vunpack.c.l.b16 %v360
    %v457 = vunpack.c.l.b16 %v361
    %v458 = vunpack.c.l.b16 %v362
    %v459 = vunpack.c.l.b16 %v363
    %v460 = vunpack.c.l.b16 %v364
    %v461 = vunpack.c.l.b16 %v365
    %v462 = vunpack.c.l.b16 %v366
    %v463 = vunpack.c.l.b16 %v367
    %v464 = vunpack.c.l.b16 %v368
    %v465 = vunpack.c.l.b16 %v369
    %v466 = vunpack.c.l.b16 %v370
    %v467 = vunpack.c.l.b16 %v371
    %v468 = vunpack.c.l.b16 %v372
    %v469 = vunpack.c.l.b16 %v373
    %v470 = vunpack.c.l.b16 %v374
    %v471 = vunpack.c.l.b16 %v375
    %v472 = vunpack.c.l.b16 %v376
    %v473 = vunpack.c.l.b16 %v377
    %v474 = vunpack.c.l.b16 %v378
    %v475 = vunpack.c.l.b16 %v379
    %v476 = vunpack.c.l.b16 %v380
    %v477 = vunpack.c.l.b16 %v381
    %v478 = vunpack.c.l.b16 %v382
    %v479 = vunpack.c.l.b16 %v383
    %v480 = vunpack.c.l.b16 %v384
    %v481 = vunpack.c.l.b16 %v385
    %v482 = vunpack.c.l.b16 %v386
    %v483 = vunpack.c.l.b16 %v387
    %v484 = vpack.c.b16 %v437, %v436
    %v485 = vpack.c.b16 %v439, %v438
    %v486 = vpack.c.b16 %v441, %v440
    %v487 = vpack.c.b16 %v443, %v442
    %v488 = vpack.c.b16 %v445, %v444
    %v489 = vpack.c.b16 %v447, %v446
    %v490 = vpack.c.b16 %v449, %v448
    %v491 = vpack.c.b16 %v451, %v450
    %v492 = vpack.c.b16 %v453, %v452
    %v493 = vpack.c.b16 %v455, %v454
    %v494 = vpack.c.b16 %v457, %v456
    %v495 = vpack.c.b16 %v459, %v458
    %v496 = vpack.c.b16 %v461, %v460
    %v497 = vpack.c.b16 %v463, %v462
    %v498 = vpack.c.b16 %v465, %v464
    %v499 = vpack.c.b16 %v467, %v466
    %v500 = vpack.c.b16 %v469, %v468
    %v501 = vpack.c.b16 %v471, %v470
    %v502 = vpack.c.b16 %v473, %v472
    %v503 = vpack.c.b16 %v475, %v474
    %v504 = vpack.c.b16 %v477, %v476
    %v505 = vpack.c.b16 %v479, %v478
    %v506 = vpack.c.b16 %v481, %v480
    %v507 = vpack.c.b16 %v483, %v482
    %532 = vmatprep.subr.bf16.mxu0 0
    %533 = vmatpush1.bf16.msra.mxu0 %v484
    %534 = vmatprep.subr.bf16.mxu0 0
    %535 = vmatpush1.bf16.msra.mxu0 %v485
    %536 = vmatprep.subr.bf16.mxu0 0
    %537 = vmatpush1.bf16.msra.mxu0 %v486
    %538 = vmatprep.subr.bf16.mxu0 0
    %539 = vmatpush1.bf16.msra.mxu0 %v487
    %540 = vmatprep.subr.bf16.mxu0 0
    %541 = vmatpush1.bf16.msra.mxu0 %v488
    %542 = vmatprep.subr.bf16.mxu0 0
    %543 = vmatpush1.bf16.msra.mxu0 %v489
    %544 = vmatprep.subr.bf16.mxu0 0
    %545 = vmatpush1.bf16.msra.mxu0 %v490
    %546 = vmatprep.subr.bf16.mxu0 0
    %547 = vmatpush1.bf16.msra.mxu0 %v491
    %548 = vmatprep.subr.bf16.mxu0 0
    %549 = vmatpush1.bf16.msra.mxu0 %v492
    %550 = vmatprep.subr.bf16.mxu0 0
    %551 = vmatpush1.bf16.msra.mxu0 %v493
    %552 = vmatprep.subr.bf16.mxu0 0
    %553 = vmatpush1.bf16.msra.mxu0 %v494
    %554 = vmatprep.subr.bf16.mxu0 0
    %555 = vmatpush1.bf16.msra.mxu0 %v495
    %556 = vmatprep.subr.bf16.mxu0 0
    %557 = vmatpush1.bf16.msra.mxu0 %v496
    %558 = vmatprep.subr.bf16.mxu0 0
    %559 = vmatpush1.bf16.msra.mxu0 %v497
    %560 = vmatprep.subr.bf16.mxu0 0
    %561 = vmatpush1.bf16.msra.mxu0 %v498
    %562 = vmatprep.subr.bf16.mxu0 0
    %563 = vmatpush1.bf16.msra.mxu0 %v499
    %564 = vmatprep.mubr.bf16.mxu0 %v338
    %565 = vmatmul.mubr.bf16.gmra.mrb[0].mxu0 %v337
    %v566 = vpop.f32.mrb[0].mxu0
    %v567 = vadd.f32 0.0, %v566
    %v568 = vpop.f32.mrb[0].mxu0
    %v569 = vpop.f32.mrb[0].mxu0
    %v570 = vadd.f32 0.0, %v569
    %v571 = vpop.f32.mrb[0].mxu0
    %572 = vdwg.mxu0
    %573 = vmatprep.subr.bf16.mxu0 0
    %574 = vmatpush1.bf16.msra.mxu0 %v500
    %575 = vmatprep.subr.bf16.mxu0 0
    %576 = vmatpush1.bf16.msra.mxu0 %v501
    %577 = vmatprep.subr.bf16.mxu0 0
    %578 = vmatpush1.bf16.msra.mxu0 %v502
    %579 = vmatprep.subr.bf16.mxu0 0
    %580 = vmatpush1.bf16.msra.mxu0 %v503
    %581 = vmatprep.subr.bf16.mxu0 0
    %582 = vmatpush1.bf16.msra.mxu0 %v504
    %583 = vmatprep.subr.bf16.mxu0 0
    %584 = vmatpush1.bf16.msra.mxu0 %v505
    %585 = vmatprep.subr.bf16.mxu0 0
    %586 = vmatpush1.bf16.msra.mxu0 %v506
    %587 = vmatprep.subr.bf16.mxu0 0
    %588 = vmatpush1.bf16.msra.mxu0 %v507
    %589 = vmatprep.subr.bf16.mxu0 0
    %590 = vmatpush1.bf16.msra.mxu0 0
    %591 = vmatprep.subr.bf16.mxu0 0
    %592 = vmatpush1.bf16.msra.mxu0 0
    %593 = vmatprep.subr.bf16.mxu0 0
    %594 = vmatpush1.bf16.msra.mxu0 0
    %595 = vmatprep.subr.bf16.mxu0 0
    %596 = vmatpush1.bf16.msra.mxu0 0
    %597 = vmatprep.subr.bf16.mxu0 0
    %598 = vmatpush1.bf16.msra.mxu0 0
    %599 = vmatprep.subr.bf16.mxu0 0
    %600 = vmatpush1.bf16.msra.mxu0 0
    %601 = vmatprep.subr.bf16.mxu0 0
    %602 = vmatpush1.bf16.msra.mxu0 0
    %603 = vmatprep.subr.bf16.mxu0 0
    %604 = vmatpush1.bf16.msra.mxu0 0
    %605 = vmatprep.mubr.bf16.mxu0 0
    %606 = vmatmul.mubr.bf16.gmra.mrb[0].mxu0 %v339
    %v607 = vpop.f32.mrb[0].mxu0
    %v608 = vadd.f32 %v567, %v607
    %v609 = vpop.f32.mrb[0].mxu0
    %v610 = vpop.f32.mrb[0].mxu0
    %v611 = vadd.f32 %v570, %v610
    %v612 = vpop.f32.mrb[0].mxu0
    %613 = vdwg.mxu0
    %v614 = vld [vmem:[%s4] sm:$0x1]
    %v615 = vlaneseq
    %v616 = vshrl.u32 %v615, 7
    %v617 = vsub.s32 0, %v616
    %v618 = vrot.slane %v614, %v617
    %v619 = vmul.f32 %v608, %v618
    %v620 = vmul.f32 %v611, %v618
    %v621 = vld [vmem:[%s4 + $0x1] sm:$0x1]
    %v622 = vlaneseq
    %v623 = vshrl.u32 %v622, 7
    %v624 = vsub.s32 0, %v623
    %v625 = vrot.slane %v621, %v624
    %v626 = vadd.f32 %v619, %v625
    %v627 = vadd.f32 %v620, %v625
    %v628 = vmax.f32 %v626, 0.0
    %v629 = vmax.f32 %v627, 0.0
    %630 = vst [vmem:[#allocation7] sm:$0xff] %v628
    %631 = vst [vmem:[#allocation7 + $0x8] sm:$0xff] %v629
    %632 = vst [vmem:[#allocation4] sm:$0x1] 0.0
    %s633 = scalar_lea.vmem [#allocation7], 1
    %v634 = vld [vmem:[%s633] ss:$2 sm:$0x7]
    %v636 = vrot.slane %v634, 7
    %638 = vst [vmem:[#allocation4] sm:$0xe] %v636
    %639 = vst [vmem:[#allocation4 + $0x4] sm:$0x1] 0.0
    %s640 = scalar_lea.vmem [#allocation7], 9
    %v641 = vld [vmem:[%s640] ss:$2 sm:$0x7]
    %v643 = vrot.slane %v641, 3
    %645 = vst [vmem:[#allocation4] sm:$0xe0] %v643
    %v646 = vld [vmem:[#allocation7] ss:$2 sm:$0xff]
    %647 = vst [vmem:[#allocation4 + $0x8] sm:$0xff] %v646
    %v648 = vld [vmem:[%s633] ss:$2 sm:$0xff]
    %649 = vst [vmem:[#allocation4 + $0x10] sm:$0xff] %v648
    %v650 = vld [vmem:[#allocation4] sm:$0xff]
    %v651 = vld [vmem:[#allocation4 + $0x8] sm:$0xff]
    %v652 = vld [vmem:[#allocation4 + $0x10] sm:$0xff]
    %v653 = vpack.c.bf16 %v650, %v650
    %v654 = vpack.c.bf16 %v651, %v651
    %v655 = vpack.c.bf16 %v652, %v652
    %v656 = vld [vmem:[%s5] sm:$0xf]
    %v657 = vld [vmem:[%s5 + $0x4] sm:$0xf]
    %v658 = vld [vmem:[%s5 + $0x8] sm:$0xf]
    %v659 = vld [vmem:[%s5 + $0xc] sm:$0xf]
    %v660 = vld [vmem:[%s5 + $0x10] sm:$0xf]
    %v661 = vld [vmem:[%s5 + $0x14] sm:$0xf]
    %v662 = vld [vmem:[%s5 + $0x18] sm:$0xf]
    %v663 = vld [vmem:[%s5 + $0x1c] sm:$0xf]
    %v664 = vld [vmem:[%s5 + $0x20] sm:$0xf]
    %v665 = vld [vmem:[%s5 + $0x24] sm:$0xf]
    %v666 = vld [vmem:[%s5 + $0x28] sm:$0xf]
    %v667 = vld [vmem:[%s5 + $0x2c] sm:$0xf]
    %v668 = vld [vmem:[%s5 + $0x30] sm:$0xf]
    %v669 = vld [vmem:[%s5 + $0x34] sm:$0xf]
    %v670 = vld [vmem:[%s5 + $0x38] sm:$0xf]
    %v671 = vld [vmem:[%s5 + $0x3c] sm:$0xf]
    %v672 = vld [vmem:[%s5 + $0x40] sm:$0xf]
    %v673 = vld [vmem:[%s5 + $0x44] sm:$0xf]
    %v674 = vld [vmem:[%s5 + $0x48] sm:$0xf]
    %v675 = vld [vmem:[%s5 + $0x4c] sm:$0xf]
    %v676 = vld [vmem:[%s5 + $0x50] sm:$0xf]
    %v677 = vld [vmem:[%s5 + $0x54] sm:$0xf]
    %v678 = vld [vmem:[%s5 + $0x58] sm:$0xf]
    %v679 = vld [vmem:[%s5 + $0x5c] sm:$0xf]
    %v680 = vld [vmem:[%s5 + $0x60] sm:$0xf]
    %v681 = vld [vmem:[%s5 + $0x64] sm:$0xf]
    %v682 = vld [vmem:[%s5 + $0x68] sm:$0xf]
    %v683 = vld [vmem:[%s5 + $0x6c] sm:$0xf]
    %v684 = vld [vmem:[%s5 + $0x70] sm:$0xf]
    %v685 = vld [vmem:[%s5 + $0x74] sm:$0xf]
    %v686 = vld [vmem:[%s5 + $0x78] sm:$0xf]
    %v687 = vld [vmem:[%s5 + $0x7c] sm:$0xf]
    %v688 = vld [vmem:[%s5 + $0x80] sm:$0xf]
    %v689 = vld [vmem:[%s5 + $0x84] sm:$0xf]
    %v690 = vld [vmem:[%s5 + $0x88] sm:$0xf]
    %v691 = vld [vmem:[%s5 + $0x8c] sm:$0xf]
    %v692 = vld [vmem:[%s5 + $0x90] sm:$0xf]
    %v693 = vld [vmem:[%s5 + $0x94] sm:$0xf]
    %v694 = vld [vmem:[%s5 + $0x98] sm:$0xf]
    %v695 = vld [vmem:[%s5 + $0x9c] sm:$0xf]
    %v696 = vld [vmem:[%s5 + $0xa0] sm:$0xf]
    %v697 = vld [vmem:[%s5 + $0xa4] sm:$0xf]
    %v698 = vld [vmem:[%s5 + $0xa8] sm:$0xf]
    %v699 = vld [vmem:[%s5 + $0xac] sm:$0xf]
    %v700 = vld [vmem:[%s5 + $0xb0] sm:$0xf]
    %v701 = vld [vmem:[%s5 + $0xb4] sm:$0xf]
    %v702 = vld [vmem:[%s5 + $0xb8] sm:$0xf]
    %v703 = vld [vmem:[%s5 + $0xbc] sm:$0xf]
    %v752 = vunpack.c.l.b16 %v656
    %v753 = vunpack.c.l.b16 %v657
    %v754 = vunpack.c.l.b16 %v658
    %v755 = vunpack.c.l.b16 %v659
    %v756 = vunpack.c.l.b16 %v660
    %v757 = vunpack.c.l.b16 %v661
    %v758 = vunpack.c.l.b16 %v662
    %v759 = vunpack.c.l.b16 %v663
    %v760 = vunpack.c.l.b16 %v664
    %v761 = vunpack.c.l.b16 %v665
    %v762 = vunpack.c.l.b16 %v666
    %v763 = vunpack.c.l.b16 %v667
    %v764 = vunpack.c.l.b16 %v668
    %v765 = vunpack.c.l.b16 %v669
    %v766 = vunpack.c.l.b16 %v670
    %v767 = vunpack.c.l.b16 %v671
    %v768 = vunpack.c.l.b16 %v672
    %v769 = vunpack.c.l.b16 %v673
    %v770 = vunpack.c.l.b16 %v674
    %v771 = vunpack.c.l.b16 %v675
    %v772 = vunpack.c.l.b16 %v676
    %v773 = vunpack.c.l.b16 %v677
    %v774 = vunpack.c.l.b16 %v678
    %v775 = vunpack.c.l.b16 %v679
    %v776 = vunpack.c.l.b16 %v680
    %v777 = vunpack.c.l.b16 %v681
    %v778 = vunpack.c.l.b16 %v682
    %v779 = vunpack.c.l.b16 %v683
    %v780 = vunpack.c.l.b16 %v684
    %v781 = vunpack.c.l.b16 %v685
    %v782 = vunpack.c.l.b16 %v686
    %v783 = vunpack.c.l.b16 %v687
    %v784 = vunpack.c.l.b16 %v688
    %v785 = vunpack.c.l.b16 %v689
    %v786 = vunpack.c.l.b16 %v690
    %v787 = vunpack.c.l.b16 %v691
    %v788 = vunpack.c.l.b16 %v692
    %v789 = vunpack.c.l.b16 %v693
    %v790 = vunpack.c.l.b16 %v694
    %v791 = vunpack.c.l.b16 %v695
    %v792 = vunpack.c.l.b16 %v696
    %v793 = vunpack.c.l.b16 %v697
    %v794 = vunpack.c.l.b16 %v698
    %v795 = vunpack.c.l.b16 %v699
    %v796 = vunpack.c.l.b16 %v700
    %v797 = vunpack.c.l.b16 %v701
    %v798 = vunpack.c.l.b16 %v702
    %v799 = vunpack.c.l.b16 %v703
    %v800 = vpack.c.b16 %v753, %v752
    %v801 = vpack.c.b16 %v755, %v754
    %v802 = vpack.c.b16 %v757, %v756
    %v803 = vpack.c.b16 %v759, %v758
    %v804 = vpack.c.b16 %v761, %v760
    %v805 = vpack.c.b16 %v763, %v762
    %v806 = vpack.c.b16 %v765, %v764
    %v807 = vpack.c.b16 %v767, %v766
    %v808 = vpack.c.b16 %v769, %v768
    %v809 = vpack.c.b16 %v771, %v770
    %v810 = vpack.c.b16 %v773, %v772
    %v811 = vpack.c.b16 %v775, %v774
    %v812 = vpack.c.b16 %v777, %v776
    %v813 = vpack.c.b16 %v779, %v778
    %v814 = vpack.c.b16 %v781, %v780
    %v815 = vpack.c.b16 %v783, %v782
    %v816 = vpack.c.b16 %v785, %v784
    %v817 = vpack.c.b16 %v787, %v786
    %v818 = vpack.c.b16 %v789, %v788
    %v819 = vpack.c.b16 %v791, %v790
    %v820 = vpack.c.b16 %v793, %v792
    %v821 = vpack.c.b16 %v795, %v794
    %v822 = vpack.c.b16 %v797, %v796
    %v823 = vpack.c.b16 %v799, %v798
    %848 = vmatprep.subr.bf16.mxu0 0
    %849 = vmatpush1.bf16.msra.mxu0 %v800
    %850 = vmatprep.subr.bf16.mxu0 0
    %851 = vmatpush1.bf16.msra.mxu0 %v801
    %852 = vmatprep.subr.bf16.mxu0 0
    %853 = vmatpush1.bf16.msra.mxu0 %v802
    %854 = vmatprep.subr.bf16.mxu0 0
    %855 = vmatpush1.bf16.msra.mxu0 %v803
    %856 = vmatprep.subr.bf16.mxu0 0
    %857 = vmatpush1.bf16.msra.mxu0 %v804
    %858 = vmatprep.subr.bf16.mxu0 0
    %859 = vmatpush1.bf16.msra.mxu0 %v805
    %860 = vmatprep.subr.bf16.mxu0 0
    %861 = vmatpush1.bf16.msra.mxu0 %v806
    %862 = vmatprep.subr.bf16.mxu0 0
    %863 = vmatpush1.bf16.msra.mxu0 %v807
    %864 = vmatprep.subr.bf16.mxu0 0
    %865 = vmatpush1.bf16.msra.mxu0 %v808
    %866 = vmatprep.subr.bf16.mxu0 0
    %867 = vmatpush1.bf16.msra.mxu0 %v809
    %868 = vmatprep.subr.bf16.mxu0 0
    %869 = vmatpush1.bf16.msra.mxu0 %v810
    %870 = vmatprep.subr.bf16.mxu0 0
    %871 = vmatpush1.bf16.msra.mxu0 %v811
    %872 = vmatprep.subr.bf16.mxu0 0
    %873 = vmatpush1.bf16.msra.mxu0 %v812
    %874 = vmatprep.subr.bf16.mxu0 0
    %875 = vmatpush1.bf16.msra.mxu0 %v813
    %876 = vmatprep.subr.bf16.mxu0 0
    %877 = vmatpush1.bf16.msra.mxu0 %v814
    %878 = vmatprep.subr.bf16.mxu0 0
    %879 = vmatpush1.bf16.msra.mxu0 %v815
    %880 = vmatprep.mubr.bf16.mxu0 %v654
    %881 = vmatmul.mubr.bf16.gmra.mrb[0].mxu0 %v653
    %v882 = vpop.f32.mrb[0].mxu0
    %v883 = vadd.f32 0.0, %v882
    %v884 = vpop.f32.mrb[0].mxu0
    %v885 = vpop.f32.mrb[0].mxu0
    %v886 = vpop.f32.mrb[0].mxu0
    %887 = vdwg.mxu0
    %888 = vmatprep.subr.bf16.mxu0 0
    %889 = vmatpush1.bf16.msra.mxu0 %v816
    %890 = vmatprep.subr.bf16.mxu0 0
    %891 = vmatpush1.bf16.msra.mxu0 %v817
    %892 = vmatprep.subr.bf16.mxu0 0
    %893 = vmatpush1.bf16.msra.mxu0 %v818
    %894 = vmatprep.subr.bf16.mxu0 0
    %895 = vmatpush1.bf16.msra.mxu0 %v819
    %896 = vmatprep.subr.bf16.mxu0 0
    %897 = vmatpush1.bf16.msra.mxu0 %v820
    %898 = vmatprep.subr.bf16.mxu0 0
    %899 = vmatpush1.bf16.msra.mxu0 %v821
    %900 = vmatprep.subr.bf16.mxu0 0
    %901 = vmatpush1.bf16.msra.mxu0 %v822
    %902 = vmatprep.subr.bf16.mxu0 0
    %903 = vmatpush1.bf16.msra.mxu0 %v823
    %904 = vmatprep.subr.bf16.mxu0 0
    %905 = vmatpush1.bf16.msra.mxu0 0
    %906 = vmatprep.subr.bf16.mxu0 0
    %907 = vmatpush1.bf16.msra.mxu0 0
    %908 = vmatprep.subr.bf16.mxu0 0
    %909 = vmatpush1.bf16.msra.mxu0 0
    %910 = vmatprep.subr.bf16.mxu0 0
    %911 = vmatpush1.bf16.msra.mxu0 0
    %912 = vmatprep.subr.bf16.mxu0 0
    %913 = vmatpush1.bf16.msra.mxu0 0
    %914 = vmatprep.subr.bf16.mxu0 0
    %915 = vmatpush1.bf16.msra.mxu0 0
    %916 = vmatprep.subr.bf16.mxu0 0
    %917 = vmatpush1.bf16.msra.mxu0 0
    %918 = vmatprep.subr.bf16.mxu0 0
    %919 = vmatpush1.bf16.msra.mxu0 0
    %920 = vmatprep.mubr.bf16.mxu0 0
    %921 = vmatmul.mubr.bf16.gmra.mrb[0].mxu0 %v655
    %v922 = vpop.f32.mrb[0].mxu0
    %v923 = vadd.f32 %v883, %v922
    %v924 = vpop.f32.mrb[0].mxu0
    %v925 = vpop.f32.mrb[0].mxu0
    %v926 = vpop.f32.mrb[0].mxu0
    %927 = vdwg.mxu0
    %v928 = vld [vmem:[%s6] sm:$0x1]
    %v929 = vlaneseq
    %v930 = vshrl.u32 %v929, 7
    %v931 = vsub.s32 0, %v930
    %v932 = vrot.slane %v928, %v931
    %v933 = vmul.f32 %v923, %v932
    %v934 = vld [vmem:[%s6 + $0x1] sm:$0x1]
    %v935 = vlaneseq
    %v936 = vshrl.u32 %v935, 7
    %v937 = vsub.s32 0, %v936
    %v938 = vrot.slane %v934, %v937
    %v939 = vadd.f32 %v933, %v938
    %v940 = vmax.f32 %v939, 0.0
    %941 = vst.msk [vmem:[#allocation8] sm:$0xff] %vm67, %v940
    %942 = vst.msk [vmem:[#allocation5] sm:$0x1] %vm51, 0.0
    %s943 = scalar_lea.vmem [#allocation8], 1
    %v944 = vld [vmem:[%s943] ss:$2 sm:$0x1]
    %945 = vst.msk [vmem:[#allocation5 + $0x1] sm:$0x1] %vm51, %v944
    %946 = vst.msk [vmem:[#allocation5 + $0x2] sm:$0x1] %vm51, 0.0
    %s947 = scalar_lea.vmem [#allocation8], 5
    %v948 = vld [vmem:[%s947] ss:$2 sm:$0x1]
    %949 = vst.msk [vmem:[#allocation5 + $0x3] sm:$0x1] %vm51, %v948
    %v950 = vld [vmem:[#allocation8] ss:$2 sm:$0xf]
    %952 = vrot.lane.b32.xlu0 %v950, 64
    %v953 = vpop.permute.xlu0 %952
    %vm955 = vcmask 1043968
    %956 = vst.msk [vmem:[#allocation5] sm:$0xf] %vm955, %v953
    %v957 = vld [vmem:[%s943] ss:$2 sm:$0xf]
    %vm958 = vcmask 519168
    %959 = vst.msk [vmem:[#allocation5 + $0x4] sm:$0xf] %vm958, %v957
    %v960 = vld [vmem:[#allocation5] sm:$0xff]
    %v962 = vcombine.high %v960, %v960
    %v964 = vpack.c.bf16 %v960, %v960
    %v965 = vpack.c.bf16 %v962, %v962
    %v966 = vld [vmem:[%s7] sm:$0xf]
    %v967 = vld [vmem:[%s7 + $0x4] sm:$0xf]
    %v968 = vld [vmem:[%s7 + $0x8] sm:$0xf]
    %v969 = vld [vmem:[%s7 + $0xc] sm:$0xf]
    %v970 = vld [vmem:[%s7 + $0x10] sm:$0xf]
    %v971 = vld [vmem:[%s7 + $0x14] sm:$0xf]
    %v972 = vld [vmem:[%s7 + $0x18] sm:$0xf]
    %v973 = vld [vmem:[%s7 + $0x1c] sm:$0xf]
    %v974 = vld [vmem:[%s7 + $0x20] sm:$0xf]
    %v975 = vld [vmem:[%s7 + $0x24] sm:$0xf]
    %v976 = vld [vmem:[%s7 + $0x28] sm:$0xf]
    %v977 = vld [vmem:[%s7 + $0x2c] sm:$0xf]
    %v978 = vld [vmem:[%s7 + $0x30] sm:$0xf]
    %v979 = vld [vmem:[%s7 + $0x34] sm:$0xf]
    %v980 = vld [vmem:[%s7 + $0x38] sm:$0xf]
    %v981 = vld [vmem:[%s7 + $0x3c] sm:$0xf]
    %v982 = vld [vmem:[%s7 + $0x40] sm:$0xf]
    %v983 = vld [vmem:[%s7 + $0x44] sm:$0xf]
    %v984 = vld [vmem:[%s7 + $0x48] sm:$0xf]
    %v985 = vld [vmem:[%s7 + $0x4c] sm:$0xf]
    %v986 = vld [vmem:[%s7 + $0x50] sm:$0xf]
    %v987 = vld [vmem:[%s7 + $0x54] sm:$0xf]
    %v988 = vld [vmem:[%s7 + $0x58] sm:$0xf]
    %v989 = vld [vmem:[%s7 + $0x5c] sm:$0xf]
    %v1014 = vunpack.c.l.b16 %v966
    %v1015 = vunpack.c.l.b16 %v967
    %v1016 = vunpack.c.l.b16 %v968
    %v1017 = vunpack.c.l.b16 %v969
    %v1018 = vunpack.c.l.b16 %v970
    %v1019 = vunpack.c.l.b16 %v971
    %v1020 = vunpack.c.l.b16 %v972
    %v1021 = vunpack.c.l.b16 %v973
    %v1022 = vunpack.c.l.b16 %v974
    %v1023 = vunpack.c.l.b16 %v975
    %v1024 = vunpack.c.l.b16 %v976
    %v1025 = vunpack.c.l.b16 %v977
    %v1026 = vunpack.c.l.b16 %v978
    %v1027 = vunpack.c.l.b16 %v979
    %v1028 = vunpack.c.l.b16 %v980
    %v1029 = vunpack.c.l.b16 %v981
    %v1030 = vunpack.c.l.b16 %v982
    %v1031 = vunpack.c.l.b16 %v983
    %v1032 = vunpack.c.l.b16 %v984
    %v1033 = vunpack.c.l.b16 %v985
    %v1034 = vunpack.c.l.b16 %v986
    %v1035 = vunpack.c.l.b16 %v987
    %v1036 = vunpack.c.l.b16 %v988
    %v1037 = vunpack.c.l.b16 %v989
    %v1038 = vpack.c.b16 %v1015, %v1014
    %v1039 = vpack.c.b16 %v1017, %v1016
    %v1040 = vpack.c.b16 %v1019, %v1018
    %v1041 = vpack.c.b16 %v1021, %v1020
    %v1042 = vpack.c.b16 %v1023, %v1022
    %v1043 = vpack.c.b16 %v1025, %v1024
    %v1044 = vpack.c.b16 %v1027, %v1026
    %v1045 = vpack.c.b16 %v1029, %v1028
    %v1046 = vpack.c.b16 %v1031, %v1030
    %v1047 = vpack.c.b16 %v1033, %v1032
    %v1048 = vpack.c.b16 %v1035, %v1034
    %v1049 = vpack.c.b16 %v1037, %v1036
    %v1063 = vsel %vm67, %v965, 0
    %1065 = vmatprep.subr.bf16.mxu0 0
    %1066 = vmatpush1.bf16.msra.mxu0 %v1038
    %1067 = vmatprep.subr.bf16.mxu0 0
    %1068 = vmatpush1.bf16.msra.mxu0 %v1039
    %1069 = vmatprep.subr.bf16.mxu0 0
    %1070 = vmatpush1.bf16.msra.mxu0 %v1040
    %1071 = vmatprep.subr.bf16.mxu0 0
    %1072 = vmatpush1.bf16.msra.mxu0 %v1041
    %1073 = vmatprep.subr.bf16.mxu0 0
    %1074 = vmatpush1.bf16.msra.mxu0 %v1042
    %1075 = vmatprep.subr.bf16.mxu0 0
    %1076 = vmatpush1.bf16.msra.mxu0 %v1043
    %1077 = vmatprep.subr.bf16.mxu0 0
    %1078 = vmatpush1.bf16.msra.mxu0 %v1044
    %1079 = vmatprep.subr.bf16.mxu0 0
    %1080 = vmatpush1.bf16.msra.mxu0 %v1045
    %1081 = vmatprep.subr.bf16.mxu0 0
    %1082 = vmatpush1.bf16.msra.mxu0 %v1046
    %1083 = vmatprep.subr.bf16.mxu0 0
    %1084 = vmatpush1.bf16.msra.mxu0 %v1047
    %1085 = vmatprep.subr.bf16.mxu0 0
    %1086 = vmatpush1.bf16.msra.mxu0 %v1048
    %1087 = vmatprep.subr.bf16.mxu0 0
    %1088 = vmatpush1.bf16.msra.mxu0 %v1049
    %1089 = vmatprep.subr.bf16.mxu0 0
    %1090 = vmatpush1.bf16.msra.mxu0 0
    %1091 = vmatprep.subr.bf16.mxu0 0
    %1092 = vmatpush1.bf16.msra.mxu0 0
    %1093 = vmatprep.subr.bf16.mxu0 0
    %1094 = vmatpush1.bf16.msra.mxu0 0
    %1095 = vmatprep.subr.bf16.mxu0 0
    %1096 = vmatpush1.bf16.msra.mxu0 0
    %1097 = vmatprep.mubr.bf16.mxu0 %v1063
    %1098 = vmatmul.mubr.bf16.gmra.mrb[0].mxu0 %v964
    %v1099 = vpop.f32.mrb[0].mxu0
    %v1100 = vadd.f32 0.0, %v1099
    %v1101 = vpop.f32.mrb[0].mxu0
    %v1102 = vpop.f32.mrb[0].mxu0
    %v1103 = vpop.f32.mrb[0].mxu0
    %1104 = vdwg.mxu0
    %v1105 = vld [vmem:[%s8] sm:$0x1]
    %v1106 = vlaneseq
    %v1107 = vshrl.u32 %v1106, 7
    %v1108 = vsub.s32 0, %v1107
    %v1109 = vrot.slane %v1105, %v1108
    %v1110 = vmul.f32 %v1100, %v1109
    %v1111 = vld [vmem:[%s8 + $0x1] sm:$0x1]
    %v1112 = vlaneseq
    %v1113 = vshrl.u32 %v1112, 7
    %v1114 = vsub.s32 0, %v1113
    %v1115 = vrot.slane %v1111, %v1114
    %v1116 = vadd.f32 %v1110, %v1115
    %v1117 = vmax.f32 %v1116, 0.0
    %v1118 = vpack.c.bf16 %v1117, %v1117
    %v1119 = vld [vmem:[#allocation9] sm:$0xf]
    %v1120 = vld [vmem:[#allocation9 + $0x4] sm:$0xf]
    %v1121 = vld [vmem:[#allocation9 + $0x8] sm:$0xf]
    %v1122 = vld [vmem:[#allocation9 + $0xc] sm:$0xf]
    %v1123 = vld [vmem:[#allocation9 + $0x10] sm:$0xf]
    %v1124 = vld [vmem:[#allocation9 + $0x14] sm:$0xf]
    %v1125 = vld [vmem:[#allocation9 + $0x18] sm:$0xf]
    %v1126 = vld [vmem:[#allocation9 + $0x1c] sm:$0xf]
    %v1135 = vunpack.c.l.b16 %v1119
    %v1136 = vunpack.c.l.b16 %v1120
    %v1137 = vunpack.c.l.b16 %v1121
    %v1138 = vunpack.c.l.b16 %v1122
    %v1139 = vunpack.c.l.b16 %v1123
    %v1140 = vunpack.c.l.b16 %v1124
    %v1141 = vunpack.c.l.b16 %v1125
    %v1142 = vunpack.c.l.b16 %v1126
    %v1143 = vpack.c.b16 %v1136, %v1135
    %v1144 = vpack.c.b16 %v1138, %v1137
    %v1145 = vpack.c.b16 %v1140, %v1139
    %v1146 = vpack.c.b16 %v1142, %v1141
    %v1152 = vsel %vm67, %v1118, 0
    %1154 = vmatprep.subr.bf16.mxu0 0
    %1155 = vmatpush1.bf16.msra.mxu0 %v1143
    %1156 = vmatprep.subr.bf16.mxu0 0
    %1157 = vmatpush1.bf16.msra.mxu0 %v1144
    %1158 = vmatprep.subr.bf16.mxu0 0
    %1159 = vmatpush1.bf16.msra.mxu0 %v1145
    %1160 = vmatprep.subr.bf16.mxu0 0
    %1161 = vmatpush1.bf16.msra.mxu0 %v1146
    %1162 = vmatprep.subr.bf16.mxu0 0
    %1163 = vmatpush1.bf16.msra.mxu0 0
    %1164 = vmatprep.subr.bf16.mxu0 0
    %1165 = vmatpush1.bf16.msra.mxu0 0
    %1166 = vmatprep.subr.bf16.mxu0 0
    %1167 = vmatpush1.bf16.msra.mxu0 0
    %1168 = vmatprep.subr.bf16.mxu0 0
    %1169 = vmatpush1.bf16.msra.mxu0 0
    %1170 = vmatprep.subr.bf16.mxu0 0
    %1171 = vmatpush1.bf16.msra.mxu0 0
    %1172 = vmatprep.subr.bf16.mxu0 0
    %1173 = vmatpush1.bf16.msra.mxu0 0
    %1174 = vmatprep.subr.bf16.mxu0 0
    %1175 = vmatpush1.bf16.msra.mxu0 0
    %1176 = vmatprep.subr.bf16.mxu0 0
    %1177 = vmatpush1.bf16.msra.mxu0 0
    %1178 = vmatprep.subr.bf16.mxu0 0
    %1179 = vmatpush1.bf16.msra.mxu0 0
    %1180 = vmatprep.subr.bf16.mxu0 0
    %1181 = vmatpush1.bf16.msra.mxu0 0
    %1182 = vmatprep.subr.bf16.mxu0 0
    %1183 = vmatpush1.bf16.msra.mxu0 0
    %1184 = vmatprep.subr.bf16.mxu0 0
    %1185 = vmatpush1.bf16.msra.mxu0 0
    %1186 = vmatprep.mubr.bf16.mxu0 0
    %1187 = vmatmul.mubr.bf16.gmra.mrb[0].mxu0 %v1152
    %v1188 = vpop.f32.mrb[0].mxu0
    %v1189 = vadd.f32 0.0, %v1188
    %v1190 = vpop.f32.mrb[0].mxu0
    %v1191 = vpop.f32.mrb[0].mxu0
    %v1192 = vpop.f32.mrb[0].mxu0
    %1193 = vdwg.mxu0
    %1194 = vst [vmem:[#allocation12] sm:$0xf] %v1189
    // Predicated region
    $region46: #{tpu_custom_call.1} parent=1 // pred_check
      _
    $region47: #{tpu_custom_call.1} parent=1 // pred_check_branch
      %1196 = sbr.rel (0) target = $region49
    $region48: #{tpu_custom_call.1} parent=1 // pred_region
      %s1198 = ssub.s32 64, 64
      %1199 = vsyncadd [#allocation11], %s1198
      %s1201 = sshll.u32 [#allocation12], 4
      %s1202 = int_to_ptr.vmem [resolvable:$true] %s1201
      %1204 = dma.vmem_to_hbm [thread:$0]  %s1202, 64, %s10, [#allocation11]
    $region49: #{tpu_custom_call.1} parent=1 // pred_fallthru
      _
    // Predicated region
    $region50: #{tpu_custom_call.1} parent=1 // pred_check
      _
    $region51: #{tpu_custom_call.1} parent=1 // pred_check_branch
      %1206 = sbr.rel (0) target = $region53
    $region52: #{tpu_custom_call.1} parent=1 // pred_region
      %1207 = dma.done [#allocation11], 64
    $region53: #{tpu_custom_call.1} parent=1 // pred_fallthru
      _
    %1208 = vsyncpa [#allocation10], 1
    %1209 = vsyncpa [#allocation11], 1

</llo_original>
